<compile_context>
chip_gen: v7x
topology: tpu7x:2x2x1
jax: 0.10.0
libtpu: 0.0.40
codegen_flags: <defaults>
</compile_context>

<pallas_src>
import numpy as np
import jax
import jax.numpy as jnp
from jax import lax
from jax.experimental import pallas as pl
from jax.experimental.pallas import tpu as pltpu

N_JOINTS = 21
C_FEAT   = 235                  # fixed by GATConv(235, 32, 4)
HEADS    = 4
F_HEAD   = 32
HID      = HEADS * F_HEAD       # 128
K_CHEB   = 3                    # GraFormer ChebConv(K=2) -> K+1 = 3 Chebyshev terms
OUT_DIM  = 3
OUT_PAD  = 128                  # lane-dense padded output width (sliced host-side)
BN_EPS   = 1e-5
NEG_INF  = -1e30                # plain python float (host-side mask bias only)

# hand-skeleton edges from the module
EDGES = np.array([[0, 13], [0, 1], [0, 4], [0, 10], [0, 7], [13, 14], [14, 15],
                  [15, 16], [1, 2], [2, 3], [3, 17], [4, 5], [5, 6], [6, 18],
                  [10, 11], [11, 12], [12, 19], [7, 8], [8, 9], [9, 20]],
                 dtype=np.int32)
EDG_SRC = np.array([0, 0, 0, 0, 0, 1, 2, 3, 4, 5, 6, 7, 8, 9, 10, 11, 12, 13, 14, 15],
                   dtype=np.int32)
EDG_DST = np.array([13, 1, 4, 10, 7, 2, 3, 17, 5, 6, 18, 8, 9, 20, 11, 12, 19, 14, 15, 16],
                   dtype=np.int32)


# ----------------------------------------------------------------------------
# Fused two-phase kernel
# ----------------------------------------------------------------------------
def regressor_fused(targ, feat, packed, mask_bias, chebT):
    B, _, HW = targ.shape
    C = feat.shape[1]

    def kernel(t_ref, f_ref, gamma_ref, beta_ref, wext_ref, asrc_ref, gbias_ref,
               maskb_ref, chebT_ref, wcheb_ref, cbias_ref, out_ref,
               q_scr, ssum_scr, ssq_scr):
        p = pl.program_id(0)
        b = pl.program_id(1)

        @pl.when((p == 0) & (b == 0))
        def _init_stats():
            ssum_scr[...] = jnp.zeros_like(ssum_scr)
            ssq_scr[...] = jnp.zeros_like(ssq_scr)

        @pl.when(p == 0)
        def _embed():
            # q[b] = target[b] @ feature[b].T : contraction over H*W (lane axis of
            # both bf16 tiles), f32 accumulation.  No relayout of the feature tile.
            q = lax.dot_general(t_ref[...], f_ref[...],
                                dimension_numbers=(((1,), (1,)), ((), ())),
                                preferred_element_type=jnp.float32)        # [21, C] f32
            q_scr[b] = q
            ssum_scr[...] += jnp.sum(q, axis=1, keepdims=True)             # [21, 1]
            ssq_scr[...] += jnp.sum(q * q, axis=1, keepdims=True)          # [21, 1]

        @pl.when(p == 1)
        def _apply():
            # BatchNorm1d(21), training-mode batch stats (biased variance), f32.
            inv_n = 1.0 / float(B * C)
            mean = ssum_scr[...] * inv_n                                   # [21, 1]
            var = ssq_scr[...] * inv_n - mean * mean
            q = q_scr[b]                                                   # [21, C] f32
            xn = (q - mean) * lax.rsqrt(var + BN_EPS)
            xn = xn * gamma_ref[...] + beta_ref[...]
            x = jnp.maximum(xn, 0.1 * xn)                                  # LeakyReLU(0.1)
            x_bf = x.astype(jnp.bfloat16)

            # GATConv: one matmul -> head features + a_dst scores; a_src scores via a
            # tiny contract-last-dims matmul landing directly in [heads, nodes] layout.
            big = jnp.dot(x_bf, wext_ref[...],
                          preferred_element_type=jnp.float32)              # [21, 132]
            hh = big[:, :HID]                                              # [21, 128]
            asT = lax.dot_general(asrc_ref[...], x_bf,
                                  dimension_numbers=(((1,), (1,)), ((), ())),
                                  preferred_element_type=jnp.float32)      # [4, 21]
            parts = []
            for h in range(HEADS):                                         # tiny static loop
                logit = big[:, HID + h:HID + h + 1] + asT[h:h + 1, :]      # [21, 21]
                logit = jnp.maximum(logit, 0.2 * logit)                    # GAT LeakyReLU(0.2)
                logit = logit + maskb_ref[...]                             # additive -inf mask
                m = jnp.max(logit, axis=-1, keepdims=True)
                e = jnp.exp(logit - m)
                inv = pl.reciprocal(jnp.sum(e, axis=-1, keepdims=True), approx=True)
                agg = jnp.dot(e, hh[:, h * F_HEAD:(h + 1) * F_HEAD],
                              preferred_element_type=jnp.float32)          # [21, 32]
                parts.append(agg * inv)
            gat = jnp.concatenate(parts, axis=-1) + gbias_ref[...]         # [21, 128]

            # ChebConv (GraFormer style): out = sum_k T_k @ (gat @ W_k) + bias
            z = jnp.dot(gat.astype(jnp.bfloat16), wcheb_ref[...],
                        preferred_element_type=jnp.float32)                # [21, 3*128]
            acc = cbias_ref[...] + jnp.dot(chebT_ref[0], z[:, :OUT_PAD],
                                           preferred_element_type=jnp.float32)
            for k in range(1, K_CHEB):
                acc = acc + jnp.dot(chebT_ref[k], z[:, k * OUT_PAD:(k + 1) * OUT_PAD],
                                    preferred_element_type=jnp.float32)
            out_ref[...] = acc                                             # lane-dense [21, 128]

    def io_map(pv, bv):
        # phase 0: walk the batch; phase 1: stay parked on the last block -> no re-fetch.
        return (bv * (1 - pv) + (B - 1) * pv, 0, 0)

    def out_map(pv, bv):
        # phase 0: park on block 0 (never flushed mid-phase); phase 1: one block per sample.
        return (bv * pv, 0, 0)

    c2 = lambda pv, bv: (0, 0)
    c3 = lambda pv, bv: (0, 0, 0)

    grid_spec = pltpu.PrefetchScalarGridSpec(
        num_scalar_prefetch=0,
        grid=(2, B),
        in_specs=[
            pl.BlockSpec((None, N_JOINTS, HW), io_map),             # target heatmaps (bf16)
            pl.BlockSpec((None, C, HW), io_map),                    # features (bf16, natural layout)
            pl.BlockSpec((N_JOINTS, 1), c2),                        # BN gamma
            pl.BlockSpec((N_JOINTS, 1), c2),                        # BN beta
            pl.BlockSpec((C, HID + HEADS), c2),                     # [W_heads | a_dst] (bf16)
            pl.BlockSpec((HEADS, C), c2),                           # a_src rows (bf16)
            pl.BlockSpec((1, HID), c2),                             # GAT bias
            pl.BlockSpec((N_JOINTS, N_JOINTS), c2),                 # additive -inf mask
            pl.BlockSpec((K_CHEB, N_JOINTS, N_JOINTS), c3),         # Chebyshev basis
            pl.BlockSpec((HID, K_CHEB * OUT_PAD), c2),              # Cheb weights (bf16)
            pl.BlockSpec((1, OUT_PAD), c2),                         # Cheb bias (padded)
        ],
        out_specs=pl.BlockSpec((None, N_JOINTS, OUT_PAD), out_map),
        scratch_shapes=[
            pltpu.VMEM((B, N_JOINTS, C), jnp.float32),              # query embeddings
            pltpu.VMEM((N_JOINTS, 1), jnp.float32),                 # BN sum
            pltpu.VMEM((N_JOINTS, 1), jnp.float32),                 # BN sum of squares
        ],
    )

    return pl.pallas_call(
        kernel,
        out_shape=jax.ShapeDtypeStruct((B, N_JOINTS, OUT_PAD), jnp.float32),
        grid_spec=grid_spec,
        # Training-mode BatchNorm couples all samples -> both axes stay sequential.
        compiler_params=pltpu.CompilerParams(
            dimension_semantics=("arbitrary", "arbitrary")),
    )(targ, feat, packed["bn_gamma"], packed["bn_beta"], packed["w_ext"],
      packed["asrc_w"], packed["gat_bias"], mask_bias, chebT,
      packed["cheb_w"], packed["cheb_bias"])


# ----------------------------------------------------------------------------
# Host-side constants (adj_mx_from_edges + Chebyshev basis + GAT mask) & packing
# ----------------------------------------------------------------------------
def build_graph_constants():
    # adj_mx_from_edges (SemGCN): symmetric adjacency + self loops, row-normalised
    A = np.zeros((N_JOINTS, N_JOINTS), np.float32)
    A[EDGES[:, 0], EDGES[:, 1]] = 1.0
    A = np.maximum(A, A.T)
    A = A + np.eye(N_JOINTS, dtype=np.float32)
    A = A / A.sum(axis=1, keepdims=True)
    # GraFormer ChebConv: normalised Laplacian and basis [I, L, 2L^2 - I]
    d = A.sum(axis=1)
    Dm = np.diag(d ** -0.5).astype(np.float32)
    L = np.eye(N_JOINTS, dtype=np.float32) - Dm @ A @ Dm
    T = np.stack([np.eye(N_JOINTS, dtype=np.float32), L,
                  2.0 * (L @ L) - np.eye(N_JOINTS, dtype=np.float32)]).astype(np.float32)
    # dense GAT incidence (directed edges j->i as given in the module, + self loops)
    M = np.zeros((N_JOINTS, N_JOINTS), np.float32)
    M[EDG_DST, EDG_SRC] = 1.0
    M = M + np.eye(N_JOINTS, dtype=np.float32)
    mask_bias = np.where(M > 0.5, 0.0, NEG_INF).astype(np.float32)
    return jnp.asarray(T), jnp.asarray(mask_bias)


def init_params(key):
    ks = jax.random.split(key, 6)
    return dict(
        bn_gamma=jnp.ones((N_JOINTS, 1), jnp.float32),          # BatchNorm1d default init
        bn_beta=jnp.zeros((N_JOINTS, 1), jnp.float32),
        gat_w=0.05 * jax.random.normal(ks[0], (HEADS, C_FEAT, F_HEAD), jnp.float32),
        gat_att_src=0.1 * jax.random.normal(ks[1], (HEADS, F_HEAD), jnp.float32),
        gat_att_dst=0.1 * jax.random.normal(ks[2], (HEADS, F_HEAD), jnp.float32),
        gat_bias=0.01 * jax.random.normal(ks[3], (HID,), jnp.float32),
        cheb_w=0.05 * jax.random.normal(ks[4], (K_CHEB, HID, OUT_DIM), jnp.float32),
        cheb_bias=jnp.zeros((1, OUT_DIM), jnp.float32),
    )


def pack_params(p):
    """Fold GAT heads + attention vectors and Cheb weights into lane-dense bf16 matrices."""
    W = p["gat_w"]                                               # [4, 235, 32]
    w_cat = jnp.transpose(W, (1, 0, 2)).reshape(C_FEAT, HID)     # [235, 128], head-major cols
    a_dst_col = jnp.einsum('hck,hk->ch', W, p["gat_att_dst"])    # [235, 4]
    w_ext = jnp.concatenate([w_cat, a_dst_col], axis=1).astype(jnp.bfloat16)   # [235, 132]
    asrc_w = jnp.einsum('hck,hk->hc', W, p["gat_att_src"]).astype(jnp.bfloat16)  # [4, 235]
    wc = jnp.pad(p["cheb_w"], ((0, 0), (0, 0), (0, OUT_PAD - OUT_DIM)))          # [3, 128, 128]
    wcheb = jnp.transpose(wc, (1, 0, 2)).reshape(HID, K_CHEB * OUT_PAD)          # [128, 384]
    cbias = jnp.pad(p["cheb_bias"], ((0, 0), (0, OUT_PAD - OUT_DIM)))            # [1, 128]
    return dict(bn_gamma=p["bn_gamma"], bn_beta=p["bn_beta"], w_ext=w_ext,
                asrc_w=asrc_w, gat_bias=p["gat_bias"].reshape(1, HID),
                cheb_w=wcheb.astype(jnp.bfloat16), cheb_bias=cbias)


@jax.jit
def regressor_forward(feature_s, target_s, params, mask_bias, chebT):
    B, C, H, W = feature_s.shape
    # Natural [B, C, H*W] layout: reshape is a free view (no host transpose round-trip).
    # bf16 at the pallas_call boundary halves kernel DMA / VMEM; all in-kernel
    # accumulation is f32.  (If the upstream backbone emits bf16, this cast vanishes.)
    feat = feature_s.reshape(B, C, H * W).astype(jnp.bfloat16)
    targ = target_s.reshape(B, N_JOINTS, H * W).astype(jnp.bfloat16)
    packed = pack_params(params)
    out = regressor_fused(targ, feat, packed, mask_bias, chebT)   # [B, 21, 128] (padded)
    return out[..., :OUT_DIM]                                     # [B, 21, 3]


if __name__ == "__main__":
    key = jax.random.PRNGKey(0)
    k1, k2, k3 = jax.random.split(key, 3)
    B, H, W = 2, 16, 16
    feature_s = jax.random.normal(k1, (B, C_FEAT, H, W), jnp.float32)
    # synthetic "heatmaps": positive, normalised per joint
    target_s = jax.nn.softmax(jax.random.normal(k2, (B, N_JOINTS, H * W)), axis=-1)
    target_s = target_s.reshape(B, N_JOINTS, H, W).astype(jnp.float32)

    params = init_params(k3)
    chebT, mask_bias = build_graph_constants()

    out = regressor_forward(feature_s, target_s, params, mask_bias, chebT)
    out = jax.block_until_ready(out)
    assert out.shape == (B, N_JOINTS, OUT_DIM) and out.dtype == jnp.float32
    assert bool(jnp.all(jnp.isfinite(out)))
    print("KERNEL_OK")
</pallas_src>

<mosaic_0001>
module attributes {stable_mosaic.version = 11 : i64} {
  func.func @kernel(%arg0: i32, %arg1: i32, %arg2: memref<1x21x256xbf16, #tpu.memory_space<vmem>>, %arg3: memref<1x235x256xbf16, #tpu.memory_space<vmem>>, %arg4: memref<21x1xf32, #tpu.memory_space<vmem>>, %arg5: memref<21x1xf32, #tpu.memory_space<vmem>>, %arg6: memref<235x132xbf16, #tpu.memory_space<vmem>>, %arg7: memref<4x235xbf16, #tpu.memory_space<vmem>>, %arg8: memref<1x128xf32, #tpu.memory_space<vmem>>, %arg9: memref<21x21xf32, #tpu.memory_space<vmem>>, %arg10: memref<3x21x21xf32, #tpu.memory_space<vmem>>, %arg11: memref<128x384xbf16, #tpu.memory_space<vmem>>, %arg12: memref<1x128xf32, #tpu.memory_space<vmem>>, %arg13: memref<1x21x128xf32, #tpu.memory_space<vmem>>, %arg14: memref<2x21x235xf32, #tpu.memory_space<vmem>>, %arg15: memref<21x1xf32, #tpu.memory_space<vmem>>, %arg16: memref<21x1xf32, #tpu.memory_space<vmem>>) attributes {dimension_semantics = [#tpu.dimension_semantics<arbitrary>, #tpu.dimension_semantics<arbitrary>], iteration_bounds = array<i64: 2, 2>, scalar_prefetch = 0 : i64, scratch_operands = 3 : i64, tpu.core_type = #tpu.core_type<tc>, window_params = [{transform_indices = @transform_0, window_bounds = array<i64: 1, 21, 256>}, {transform_indices = @transform_1, window_bounds = array<i64: 1, 235, 256>}, {pipeline_mode = #tpu.pipeline_mode<synchronous>, transform_indices = @transform_2, window_bounds = array<i64: 21, 1>}, {pipeline_mode = #tpu.pipeline_mode<synchronous>, transform_indices = @transform_3, window_bounds = array<i64: 21, 1>}, {pipeline_mode = #tpu.pipeline_mode<synchronous>, transform_indices = @transform_4, window_bounds = array<i64: 235, 132>}, {pipeline_mode = #tpu.pipeline_mode<synchronous>, transform_indices = @transform_5, window_bounds = array<i64: 4, 235>}, {pipeline_mode = #tpu.pipeline_mode<synchronous>, transform_indices = @transform_6, window_bounds = array<i64: 1, 128>}, {pipeline_mode = #tpu.pipeline_mode<synchronous>, transform_indices = @transform_7, window_bounds = array<i64: 21, 21>}, {pipeline_mode = #tpu.pipeline_mode<synchronous>, transform_indices = @transform_8, window_bounds = array<i64: 3, 21, 21>}, {pipeline_mode = #tpu.pipeline_mode<synchronous>, transform_indices = @transform_9, window_bounds = array<i64: 128, 384>}, {pipeline_mode = #tpu.pipeline_mode<synchronous>, transform_indices = @transform_10, window_bounds = array<i64: 1, 128>}, {transform_indices = @transform_11, window_bounds = array<i64: 1, 21, 128>}]} {
    %c0_i32 = arith.constant 0 : i32
    %0 = arith.cmpi eq, %arg0, %c0_i32 : i32
    %c0_i32_0 = arith.constant 0 : i32
    %1 = arith.cmpi eq, %arg1, %c0_i32_0 : i32
    %2 = arith.andi %0, %1 : i1
    %3 = arith.extui %2 : i1 to i32
    %c0_i32_1 = arith.constant 0 : i32
    %4 = arith.cmpi ne, %3, %c0_i32_1 : i32
    scf.if %4 {
      %cst = arith.constant 0.000000e+00 : f32
      %11 = vector.broadcast %cst : f32 to vector<21x1xf32>
      %c0 = arith.constant 0 : index
      %c0_5 = arith.constant 0 : index
      %12 = vector.load %arg15[%c0, %c0_5] : memref<21x1xf32, #tpu.memory_space<vmem>>, vector<21x1xf32>
      tpu.vector_store %arg15[%c0, %c0_5], %11 {strides = array<i32>} : memref<21x1xf32, #tpu.memory_space<vmem>>, vector<21x1xf32>,
      %cst_6 = arith.constant 0.000000e+00 : f32
      %13 = vector.broadcast %cst_6 : f32 to vector<21x1xf32>
      %c0_7 = arith.constant 0 : index
      %c0_8 = arith.constant 0 : index
      %14 = vector.load %arg16[%c0_7, %c0_8] : memref<21x1xf32, #tpu.memory_space<vmem>>, vector<21x1xf32>
      tpu.vector_store %arg16[%c0_7, %c0_8], %13 {strides = array<i32>} : memref<21x1xf32, #tpu.memory_space<vmem>>, vector<21x1xf32>,
    } else {
    }
    %c0_i32_2 = arith.constant 0 : i32
    %5 = arith.cmpi eq, %arg0, %c0_i32_2 : i32
    %6 = arith.extui %5 : i1 to i32
    %c0_i32_3 = arith.constant 0 : i32
    %7 = arith.cmpi ne, %6, %c0_i32_3 : i32
    scf.if %7 {
      %c0 = arith.constant 0 : index
      %c0_5 = arith.constant 0 : index
      %c0_6 = arith.constant 0 : index
      %11 = vector.load %arg2[%c0, %c0_5, %c0_6] : memref<1x21x256xbf16, #tpu.memory_space<vmem>>, vector<1x21x256xbf16>
      %12 = vector.shape_cast %11 : vector<1x21x256xbf16> to vector<21x256xbf16>
      %c0_7 = arith.constant 0 : index
      %c0_8 = arith.constant 0 : index
      %c0_9 = arith.constant 0 : index
      %13 = vector.load %arg3[%c0_7, %c0_8, %c0_9] : memref<1x235x256xbf16, #tpu.memory_space<vmem>>, vector<1x235x256xbf16>
      %14 = vector.shape_cast %13 : vector<1x235x256xbf16> to vector<235x256xbf16>
      %cst = arith.constant dense<0.000000e+00> : vector<21x235xf32>
      %15 = tpu.matmul %12, %14, %cst {dimension_numbers = #tpu.dot_dimension_numbers<[1], [1], [0], [0], [0, 0, 1, 0], [], []>} : vector<21x256xbf16>, vector<235x256xbf16>, vector<21x235xf32> -> vector<21x235xf32>
      %16 = arith.index_cast %arg1 : i32 to index
      %c0_10 = arith.constant 0 : index
      %c0_11 = arith.constant 0 : index
      %17 = vector.load %arg14[%16, %c0_10, %c0_11] : memref<2x21x235xf32, #tpu.memory_space<vmem>>, vector<1x21x235xf32>
      %18 = vector.shape_cast %17 : vector<1x21x235xf32> to vector<21x235xf32>
      %19 = vector.shape_cast %15 : vector<21x235xf32> to vector<1x21x235xf32>
      tpu.vector_store %arg14[%16, %c0_10, %c0_11], %19 {strides = array<i32>} : memref<2x21x235xf32, #tpu.memory_space<vmem>>, vector<1x21x235xf32>,
      %c0_12 = arith.constant 0 : index
      %c0_13 = arith.constant 0 : index
      %20 = vector.load %arg15[%c0_12, %c0_13] : memref<21x1xf32, #tpu.memory_space<vmem>>, vector<21x1xf32>
      %cst_14 = arith.constant dense<0.000000e+00> : vector<21xf32>
      %21 = vector.multi_reduction <add>, %15, %cst_14 [1] : vector<21x235xf32> to vector<21xf32>
      %22 = vector.shape_cast %21 : vector<21xf32> to vector<21x1xf32>
      %23 = arith.addf %20, %22 : vector<21x1xf32>
      %c0_15 = arith.constant 0 : index
      %c0_16 = arith.constant 0 : index
      %24 = vector.load %arg15[%c0_15, %c0_16] : memref<21x1xf32, #tpu.memory_space<vmem>>, vector<21x1xf32>
      tpu.vector_store %arg15[%c0_15, %c0_16], %23 {strides = array<i32>} : memref<21x1xf32, #tpu.memory_space<vmem>>, vector<21x1xf32>,
      %c0_17 = arith.constant 0 : index
      %c0_18 = arith.constant 0 : index
      %25 = vector.load %arg16[%c0_17, %c0_18] : memref<21x1xf32, #tpu.memory_space<vmem>>, vector<21x1xf32>
      %26 = arith.mulf %15, %15 : vector<21x235xf32>
      %cst_19 = arith.constant dense<0.000000e+00> : vector<21xf32>
      %27 = vector.multi_reduction <add>, %26, %cst_19 [1] : vector<21x235xf32> to vector<21xf32>
      %28 = vector.shape_cast %27 : vector<21xf32> to vector<21x1xf32>
      %29 = arith.addf %25, %28 : vector<21x1xf32>
      %c0_20 = arith.constant 0 : index
      %c0_21 = arith.constant 0 : index
      %30 = vector.load %arg16[%c0_20, %c0_21] : memref<21x1xf32, #tpu.memory_space<vmem>>, vector<21x1xf32>
      tpu.vector_store %arg16[%c0_20, %c0_21], %29 {strides = array<i32>} : memref<21x1xf32, #tpu.memory_space<vmem>>, vector<21x1xf32>,
    } else {
    }
    %c1_i32 = arith.constant 1 : i32
    %8 = arith.cmpi eq, %arg0, %c1_i32 : i32
    %9 = arith.extui %8 : i1 to i32
    %c0_i32_4 = arith.constant 0 : i32
    %10 = arith.cmpi ne, %9, %c0_i32_4 : i32
    scf.if %10 {
      %c0 = arith.constant 0 : index
      %c0_5 = arith.constant 0 : index
      %11 = vector.load %arg15[%c0, %c0_5] : memref<21x1xf32, #tpu.memory_space<vmem>>, vector<21x1xf32>
      %cst = arith.constant 0.00212765951 : f32
      %12 = vector.broadcast %cst : f32 to vector<21x1xf32>
      %13 = arith.mulf %11, %12 : vector<21x1xf32>
      %c0_6 = arith.constant 0 : index
      %c0_7 = arith.constant 0 : index
      %14 = vector.load %arg16[%c0_6, %c0_7] : memref<21x1xf32, #tpu.memory_space<vmem>>, vector<21x1xf32>
      %cst_8 = arith.constant 0.00212765951 : f32
      %15 = vector.broadcast %cst_8 : f32 to vector<21x1xf32>
      %16 = arith.mulf %14, %15 : vector<21x1xf32>
      %17 = arith.mulf %13, %13 : vector<21x1xf32>
      %18 = arith.subf %16, %17 : vector<21x1xf32>
      %19 = arith.index_cast %arg1 : i32 to index
      %c0_9 = arith.constant 0 : index
      %c0_10 = arith.constant 0 : index
      %20 = vector.load %arg14[%19, %c0_9, %c0_10] : memref<2x21x235xf32, #tpu.memory_space<vmem>>, vector<1x21x235xf32>
      %21 = vector.shape_cast %20 : vector<1x21x235xf32> to vector<21x235xf32>
      %22 = vector.broadcast %13 : vector<21x1xf32> to vector<21x235xf32>
      %23 = arith.subf %21, %22 : vector<21x235xf32>
      %cst_11 = arith.constant 9.99999974E-6 : f32
      %24 = vector.broadcast %cst_11 : f32 to vector<21x1xf32>
      %25 = arith.addf %18, %24 : vector<21x1xf32>
      %26 = math.rsqrt %25 : vector<21x1xf32>
      %27 = vector.broadcast %26 : vector<21x1xf32> to vector<21x235xf32>
      %28 = arith.mulf %23, %27 : vector<21x235xf32>
      %c0_12 = arith.constant 0 : index
      %c0_13 = arith.constant 0 : index
      %29 = vector.load %arg4[%c0_12, %c0_13] : memref<21x1xf32, #tpu.memory_space<vmem>>, vector<21x1xf32>
      %30 = vector.broadcast %29 : vector<21x1xf32> to vector<21x235xf32>
      %31 = arith.mulf %28, %30 : vector<21x235xf32>
      %c0_14 = arith.constant 0 : index
      %c0_15 = arith.constant 0 : index
      %32 = vector.load %arg5[%c0_14, %c0_15] : memref<21x1xf32, #tpu.memory_space<vmem>>, vector<21x1xf32>
      %33 = vector.broadcast %32 : vector<21x1xf32> to vector<21x235xf32>
      %34 = arith.addf %31, %33 : vector<21x235xf32>
      %cst_16 = arith.constant 1.000000e-01 : f32
      %35 = vector.broadcast %cst_16 : f32 to vector<21x235xf32>
      %36 = arith.mulf %35, %34 : vector<21x235xf32>
      %37 = arith.maximumf %34, %36 : vector<21x235xf32>
      %38 = arith.truncf %37 : vector<21x235xf32> to vector<21x235xbf16>
      %c0_17 = arith.constant 0 : index
      %c0_18 = arith.constant 0 : index
      %39 = vector.load %arg6[%c0_17, %c0_18] : memref<235x132xbf16, #tpu.memory_space<vmem>>, vector<235x132xbf16>
      %cst_19 = arith.constant dense<0.000000e+00> : vector<21x132xf32>
      %40 = tpu.matmul %38, %39, %cst_19 {dimension_numbers = #tpu.dot_dimension_numbers<[1], [0], [0], [1], [0, 0, 1, 1], [], []>} : vector<21x235xbf16>, vector<235x132xbf16>, vector<21x132xf32> -> vector<21x132xf32>
      %41 = vector.extract_strided_slice %40 {offsets = [0, 0], sizes = [21, 128], strides = [1, 1]} : vector<21x132xf32> to vector<21x128xf32>
      %c0_20 = arith.constant 0 : index
      %c0_21 = arith.constant 0 : index
      %42 = vector.load %arg7[%c0_20, %c0_21] : memref<4x235xbf16, #tpu.memory_space<vmem>>, vector<4x235xbf16>
      %cst_22 = arith.constant dense<0.000000e+00> : vector<4x21xf32>
      %43 = tpu.matmul %42, %38, %cst_22 {dimension_numbers = #tpu.dot_dimension_numbers<[1], [1], [0], [0], [0, 0, 1, 0], [], []>} : vector<4x235xbf16>, vector<21x235xbf16>, vector<4x21xf32> -> vector<4x21xf32>
      %44 = vector.extract_strided_slice %40 {offsets = [0, 128], sizes = [21, 1], strides = [1, 1]} : vector<21x132xf32> to vector<21x1xf32>
      %45 = vector.extract_strided_slice %43 {offsets = [0, 0], sizes = [1, 21], strides = [1, 1]} : vector<4x21xf32> to vector<1x21xf32>
      %46 = vector.broadcast %44 : vector<21x1xf32> to vector<21x21xf32>
      %47 = vector.broadcast %45 : vector<1x21xf32> to vector<21x21xf32>
      %48 = arith.addf %46, %47 : vector<21x21xf32>
      %cst_23 = arith.constant 2.000000e-01 : f32
      %49 = vector.broadcast %cst_23 : f32 to vector<21x21xf32>
      %50 = arith.mulf %49, %48 : vector<21x21xf32>
      %51 = arith.maximumf %48, %50 : vector<21x21xf32>
      %c0_24 = arith.constant 0 : index
      %c0_25 = arith.constant 0 : index
      %52 = vector.load %arg9[%c0_24, %c0_25] : memref<21x21xf32, #tpu.memory_space<vmem>>, vector<21x21xf32>
      %53 = arith.addf %51, %52 : vector<21x21xf32>
      %cst_26 = arith.constant dense<0xFF800000> : vector<21xf32>
      %54 = vector.multi_reduction <maximumf>, %53, %cst_26 [1] : vector<21x21xf32> to vector<21xf32>
      %55 = vector.shape_cast %54 : vector<21xf32> to vector<21x1xf32>
      %56 = vector.broadcast %55 : vector<21x1xf32> to vector<21x21xf32>
      %57 = arith.subf %53, %56 : vector<21x21xf32>
      %58 = math.exp %57 : vector<21x21xf32>
      %cst_27 = arith.constant dense<0.000000e+00> : vector<21xf32>
      %59 = vector.multi_reduction <add>, %58, %cst_27 [1] : vector<21x21xf32> to vector<21xf32>
      %60 = vector.shape_cast %59 : vector<21xf32> to vector<21x1xf32>
      %61 = tpu.reciprocal %60 {approx = true} : vector<21x1xf32> -> vector<21x1xf32>
      %62 = vector.extract_strided_slice %41 {offsets = [0, 0], sizes = [21, 32], strides = [1, 1]} : vector<21x128xf32> to vector<21x32xf32>
      %cst_28 = arith.constant dense<0.000000e+00> : vector<21x32xf32>
      %63 = tpu.matmul %58, %62, %cst_28 {dimension_numbers = #tpu.dot_dimension_numbers<[1], [0], [0], [1], [0, 0, 1, 1], [], []>} : vector<21x21xf32>, vector<21x32xf32>, vector<21x32xf32> -> vector<21x32xf32>
      %64 = vector.broadcast %61 : vector<21x1xf32> to vector<21x32xf32>
      %65 = arith.mulf %63, %64 : vector<21x32xf32>
      %66 = vector.extract_strided_slice %40 {offsets = [0, 129], sizes = [21, 1], strides = [1, 1]} : vector<21x132xf32> to vector<21x1xf32>
      %67 = vector.extract_strided_slice %43 {offsets = [1, 0], sizes = [1, 21], strides = [1, 1]} : vector<4x21xf32> to vector<1x21xf32>
      %68 = vector.broadcast %66 : vector<21x1xf32> to vector<21x21xf32>
      %69 = vector.broadcast %67 : vector<1x21xf32> to vector<21x21xf32>
      %70 = arith.addf %68, %69 : vector<21x21xf32>
      %cst_29 = arith.constant 2.000000e-01 : f32
      %71 = vector.broadcast %cst_29 : f32 to vector<21x21xf32>
      %72 = arith.mulf %71, %70 : vector<21x21xf32>
      %73 = arith.maximumf %70, %72 : vector<21x21xf32>
      %c0_30 = arith.constant 0 : index
      %c0_31 = arith.constant 0 : index
      %74 = vector.load %arg9[%c0_30, %c0_31] : memref<21x21xf32, #tpu.memory_space<vmem>>, vector<21x21xf32>
      %75 = arith.addf %73, %74 : vector<21x21xf32>
      %cst_32 = arith.constant dense<0xFF800000> : vector<21xf32>
      %76 = vector.multi_reduction <maximumf>, %75, %cst_32 [1] : vector<21x21xf32> to vector<21xf32>
      %77 = vector.shape_cast %76 : vector<21xf32> to vector<21x1xf32>
      %78 = vector.broadcast %77 : vector<21x1xf32> to vector<21x21xf32>
      %79 = arith.subf %75, %78 : vector<21x21xf32>
      %80 = math.exp %79 : vector<21x21xf32>
      %cst_33 = arith.constant dense<0.000000e+00> : vector<21xf32>
      %81 = vector.multi_reduction <add>, %80, %cst_33 [1] : vector<21x21xf32> to vector<21xf32>
      %82 = vector.shape_cast %81 : vector<21xf32> to vector<21x1xf32>
      %83 = tpu.reciprocal %82 {approx = true} : vector<21x1xf32> -> vector<21x1xf32>
      %84 = vector.extract_strided_slice %41 {offsets = [0, 32], sizes = [21, 32], strides = [1, 1]} : vector<21x128xf32> to vector<21x32xf32>
      %cst_34 = arith.constant dense<0.000000e+00> : vector<21x32xf32>
      %85 = tpu.matmul %80, %84, %cst_34 {dimension_numbers = #tpu.dot_dimension_numbers<[1], [0], [0], [1], [0, 0, 1, 1], [], []>} : vector<21x21xf32>, vector<21x32xf32>, vector<21x32xf32> -> vector<21x32xf32>
      %86 = vector.broadcast %83 : vector<21x1xf32> to vector<21x32xf32>
      %87 = arith.mulf %85, %86 : vector<21x32xf32>
      %88 = vector.extract_strided_slice %40 {offsets = [0, 130], sizes = [21, 1], strides = [1, 1]} : vector<21x132xf32> to vector<21x1xf32>
      %89 = vector.extract_strided_slice %43 {offsets = [2, 0], sizes = [1, 21], strides = [1, 1]} : vector<4x21xf32> to vector<1x21xf32>
      %90 = vector.broadcast %88 : vector<21x1xf32> to vector<21x21xf32>
      %91 = vector.broadcast %89 : vector<1x21xf32> to vector<21x21xf32>
      %92 = arith.addf %90, %91 : vector<21x21xf32>
      %cst_35 = arith.constant 2.000000e-01 : f32
      %93 = vector.broadcast %cst_35 : f32 to vector<21x21xf32>
      %94 = arith.mulf %93, %92 : vector<21x21xf32>
      %95 = arith.maximumf %92, %94 : vector<21x21xf32>
      %c0_36 = arith.constant 0 : index
      %c0_37 = arith.constant 0 : index
      %96 = vector.load %arg9[%c0_36, %c0_37] : memref<21x21xf32, #tpu.memory_space<vmem>>, vector<21x21xf32>
      %97 = arith.addf %95, %96 : vector<21x21xf32>
      %cst_38 = arith.constant dense<0xFF800000> : vector<21xf32>
      %98 = vector.multi_reduction <maximumf>, %97, %cst_38 [1] : vector<21x21xf32> to vector<21xf32>
      %99 = vector.shape_cast %98 : vector<21xf32> to vector<21x1xf32>
      %100 = vector.broadcast %99 : vector<21x1xf32> to vector<21x21xf32>
      %101 = arith.subf %97, %100 : vector<21x21xf32>
      %102 = math.exp %101 : vector<21x21xf32>
      %cst_39 = arith.constant dense<0.000000e+00> : vector<21xf32>
      %103 = vector.multi_reduction <add>, %102, %cst_39 [1] : vector<21x21xf32> to vector<21xf32>
      %104 = vector.shape_cast %103 : vector<21xf32> to vector<21x1xf32>
      %105 = tpu.reciprocal %104 {approx = true} : vector<21x1xf32> -> vector<21x1xf32>
      %106 = vector.extract_strided_slice %41 {offsets = [0, 64], sizes = [21, 32], strides = [1, 1]} : vector<21x128xf32> to vector<21x32xf32>
      %cst_40 = arith.constant dense<0.000000e+00> : vector<21x32xf32>
      %107 = tpu.matmul %102, %106, %cst_40 {dimension_numbers = #tpu.dot_dimension_numbers<[1], [0], [0], [1], [0, 0, 1, 1], [], []>} : vector<21x21xf32>, vector<21x32xf32>, vector<21x32xf32> -> vector<21x32xf32>
      %108 = vector.broadcast %105 : vector<21x1xf32> to vector<21x32xf32>
      %109 = arith.mulf %107, %108 : vector<21x32xf32>
      %110 = vector.extract_strided_slice %40 {offsets = [0, 131], sizes = [21, 1], strides = [1, 1]} : vector<21x132xf32> to vector<21x1xf32>
      %111 = vector.extract_strided_slice %43 {offsets = [3, 0], sizes = [1, 21], strides = [1, 1]} : vector<4x21xf32> to vector<1x21xf32>
      %112 = vector.broadcast %110 : vector<21x1xf32> to vector<21x21xf32>
      %113 = vector.broadcast %111 : vector<1x21xf32> to vector<21x21xf32>
      %114 = arith.addf %112, %113 : vector<21x21xf32>
      %cst_41 = arith.constant 2.000000e-01 : f32
      %115 = vector.broadcast %cst_41 : f32 to vector<21x21xf32>
      %116 = arith.mulf %115, %114 : vector<21x21xf32>
      %117 = arith.maximumf %114, %116 : vector<21x21xf32>
      %c0_42 = arith.constant 0 : index
      %c0_43 = arith.constant 0 : index
      %118 = vector.load %arg9[%c0_42, %c0_43] : memref<21x21xf32, #tpu.memory_space<vmem>>, vector<21x21xf32>
      %119 = arith.addf %117, %118 : vector<21x21xf32>
      %cst_44 = arith.constant dense<0xFF800000> : vector<21xf32>
      %120 = vector.multi_reduction <maximumf>, %119, %cst_44 [1] : vector<21x21xf32> to vector<21xf32>
      %121 = vector.shape_cast %120 : vector<21xf32> to vector<21x1xf32>
      %122 = vector.broadcast %121 : vector<21x1xf32> to vector<21x21xf32>
      %123 = arith.subf %119, %122 : vector<21x21xf32>
      %124 = math.exp %123 : vector<21x21xf32>
      %cst_45 = arith.constant dense<0.000000e+00> : vector<21xf32>
      %125 = vector.multi_reduction <add>, %124, %cst_45 [1] : vector<21x21xf32> to vector<21xf32>
      %126 = vector.shape_cast %125 : vector<21xf32> to vector<21x1xf32>
      %127 = tpu.reciprocal %126 {approx = true} : vector<21x1xf32> -> vector<21x1xf32>
      %128 = vector.extract_strided_slice %41 {offsets = [0, 96], sizes = [21, 32], strides = [1, 1]} : vector<21x128xf32> to vector<21x32xf32>
      %cst_46 = arith.constant dense<0.000000e+00> : vector<21x32xf32>
      %129 = tpu.matmul %124, %128, %cst_46 {dimension_numbers = #tpu.dot_dimension_numbers<[1], [0], [0], [1], [0, 0, 1, 1], [], []>} : vector<21x21xf32>, vector<21x32xf32>, vector<21x32xf32> -> vector<21x32xf32>
      %130 = vector.broadcast %127 : vector<21x1xf32> to vector<21x32xf32>
      %131 = arith.mulf %129, %130 : vector<21x32xf32>
      %132 = tpu.concatenate %65, %87, %109, %131 in 1 : vector<21x32xf32>, vector<21x32xf32>, vector<21x32xf32>, vector<21x32xf32> -> vector<21x128xf32>
      %c0_47 = arith.constant 0 : index
      %c0_48 = arith.constant 0 : index
      %133 = vector.load %arg8[%c0_47, %c0_48] : memref<1x128xf32, #tpu.memory_space<vmem>>, vector<1x128xf32>
      %134 = vector.broadcast %133 : vector<1x128xf32> to vector<21x128xf32>
      %135 = arith.addf %132, %134 : vector<21x128xf32>
      %136 = arith.truncf %135 : vector<21x128xf32> to vector<21x128xbf16>
      %c0_49 = arith.constant 0 : index
      %c0_50 = arith.constant 0 : index
      %137 = vector.load %arg11[%c0_49, %c0_50] : memref<128x384xbf16, #tpu.memory_space<vmem>>, vector<128x384xbf16>
      %cst_51 = arith.constant dense<0.000000e+00> : vector<21x384xf32>
      %138 = tpu.matmul %136, %137, %cst_51 {dimension_numbers = #tpu.dot_dimension_numbers<[1], [0], [0], [1], [0, 0, 1, 1], [], []>} : vector<21x128xbf16>, vector<128x384xbf16>, vector<21x384xf32> -> vector<21x384xf32>
      %c0_52 = arith.constant 0 : index
      %c0_53 = arith.constant 0 : index
      %139 = vector.load %arg12[%c0_52, %c0_53] : memref<1x128xf32, #tpu.memory_space<vmem>>, vector<1x128xf32>
      %c0_54 = arith.constant 0 : index
      %c0_55 = arith.constant 0 : index
      %c0_56 = arith.constant 0 : index
      %140 = vector.load %arg10[%c0_54, %c0_55, %c0_56] : memref<3x21x21xf32, #tpu.memory_space<vmem>>, vector<1x21x21xf32>
      %141 = vector.shape_cast %140 : vector<1x21x21xf32> to vector<21x21xf32>
      %142 = vector.extract_strided_slice %138 {offsets = [0, 0], sizes = [21, 128], strides = [1, 1]} : vector<21x384xf32> to vector<21x128xf32>
      %cst_57 = arith.constant dense<0.000000e+00> : vector<21x128xf32>
      %143 = tpu.matmul %141, %142, %cst_57 {dimension_numbers = #tpu.dot_dimension_numbers<[1], [0], [0], [1], [0, 0, 1, 1], [], []>} : vector<21x21xf32>, vector<21x128xf32>, vector<21x128xf32> -> vector<21x128xf32>
      %144 = vector.broadcast %139 : vector<1x128xf32> to vector<21x128xf32>
      %145 = arith.addf %144, %143 : vector<21x128xf32>
      %c1 = arith.constant 1 : index
      %c0_58 = arith.constant 0 : index
      %c0_59 = arith.constant 0 : index
      %146 = vector.load %arg10[%c1, %c0_58, %c0_59] : memref<3x21x21xf32, #tpu.memory_space<vmem>>, vector<1x21x21xf32>
      %147 = vector.shape_cast %146 : vector<1x21x21xf32> to vector<21x21xf32>
      %148 = vector.extract_strided_slice %138 {offsets = [0, 128], sizes = [21, 128], strides = [1, 1]} : vector<21x384xf32> to vector<21x128xf32>
      %cst_60 = arith.constant dense<0.000000e+00> : vector<21x128xf32>
      %149 = tpu.matmul %147, %148, %cst_60 {dimension_numbers = #tpu.dot_dimension_numbers<[1], [0], [0], [1], [0, 0, 1, 1], [], []>} : vector<21x21xf32>, vector<21x128xf32>, vector<21x128xf32> -> vector<21x128xf32>
      %150 = arith.addf %145, %149 : vector<21x128xf32>
      %c2 = arith.constant 2 : index
      %c0_61 = arith.constant 0 : index
      %c0_62 = arith.constant 0 : index
      %151 = vector.load %arg10[%c2, %c0_61, %c0_62] : memref<3x21x21xf32, #tpu.memory_space<vmem>>, vector<1x21x21xf32>
      %152 = vector.shape_cast %151 : vector<1x21x21xf32> to vector<21x21xf32>
      %153 = vector.extract_strided_slice %138 {offsets = [0, 256], sizes = [21, 128], strides = [1, 1]} : vector<21x384xf32> to vector<21x128xf32>
      %cst_63 = arith.constant dense<0.000000e+00> : vector<21x128xf32>
      %154 = tpu.matmul %152, %153, %cst_63 {dimension_numbers = #tpu.dot_dimension_numbers<[1], [0], [0], [1], [0, 0, 1, 1], [], []>} : vector<21x21xf32>, vector<21x128xf32>, vector<21x128xf32> -> vector<21x128xf32>
      %155 = arith.addf %150, %154 : vector<21x128xf32>
      %c0_64 = arith.constant 0 : index
      %c0_65 = arith.constant 0 : index
      %c0_66 = arith.constant 0 : index
      %156 = vector.load %arg13[%c0_64, %c0_65, %c0_66] : memref<1x21x128xf32, #tpu.memory_space<vmem>>, vector<1x21x128xf32>
      %157 = vector.shape_cast %156 : vector<1x21x128xf32> to vector<21x128xf32>
      %158 = vector.shape_cast %155 : vector<21x128xf32> to vector<1x21x128xf32>
      tpu.vector_store %arg13[%c0_64, %c0_65, %c0_66], %158 {strides = array<i32>} : memref<1x21x128xf32, #tpu.memory_space<vmem>>, vector<1x21x128xf32>,
    } else {
    }
    return
  }
  func.func @transform_0(%arg0: i32, %arg1: i32) -> (i32, i32, i32) {
    %c1_i32 = arith.constant 1 : i32
    %0 = arith.subi %c1_i32, %arg0 : i32
    %1 = arith.muli %arg1, %0 : i32
    %c1_i32_0 = arith.constant 1 : i32
    %2 = arith.muli %c1_i32_0, %arg0 : i32
    %3 = arith.addi %1, %2 : i32
    %c0_i32 = arith.constant 0 : i32
    %c0_i32_1 = arith.constant 0 : i32
    %c0_i32_2 = arith.constant 0 : i32
    return %3, %c0_i32, %c0_i32_1 : i32, i32, i32
  }
  func.func @transform_1(%arg0: i32, %arg1: i32) -> (i32, i32, i32) {
    %c1_i32 = arith.constant 1 : i32
    %0 = arith.subi %c1_i32, %arg0 : i32
    %1 = arith.muli %arg1, %0 : i32
    %c1_i32_0 = arith.constant 1 : i32
    %2 = arith.muli %c1_i32_0, %arg0 : i32
    %3 = arith.addi %1, %2 : i32
    %c0_i32 = arith.constant 0 : i32
    %c0_i32_1 = arith.constant 0 : i32
    %c0_i32_2 = arith.constant 0 : i32
    return %3, %c0_i32, %c0_i32_1 : i32, i32, i32
  }
  func.func @transform_2(%arg0: i32, %arg1: i32) -> (i32, i32) {
    %c0_i32 = arith.constant 0 : i32
    %c0_i32_0 = arith.constant 0 : i32
    %c0_i32_1 = arith.constant 0 : i32
    return %c0_i32, %c0_i32_0 : i32, i32
  }
  func.func @transform_3(%arg0: i32, %arg1: i32) -> (i32, i32) {
    %c0_i32 = arith.constant 0 : i32
    %c0_i32_0 = arith.constant 0 : i32
    %c0_i32_1 = arith.constant 0 : i32
    return %c0_i32, %c0_i32_0 : i32, i32
  }
  func.func @transform_4(%arg0: i32, %arg1: i32) -> (i32, i32) {
    %c0_i32 = arith.constant 0 : i32
    %c0_i32_0 = arith.constant 0 : i32
    %c0_i32_1 = arith.constant 0 : i32
    return %c0_i32, %c0_i32_0 : i32, i32
  }
  func.func @transform_5(%arg0: i32, %arg1: i32) -> (i32, i32) {
    %c0_i32 = arith.constant 0 : i32
    %c0_i32_0 = arith.constant 0 : i32
    %c0_i32_1 = arith.constant 0 : i32
    return %c0_i32, %c0_i32_0 : i32, i32
  }
  func.func @transform_6(%arg0: i32, %arg1: i32) -> (i32, i32) {
    %c0_i32 = arith.constant 0 : i32
    %c0_i32_0 = arith.constant 0 : i32
    %c0_i32_1 = arith.constant 0 : i32
    return %c0_i32, %c0_i32_0 : i32, i32
  }
  func.func @transform_7(%arg0: i32, %arg1: i32) -> (i32, i32) {
    %c0_i32 = arith.constant 0 : i32
    %c0_i32_0 = arith.constant 0 : i32
    %c0_i32_1 = arith.constant 0 : i32
    return %c0_i32, %c0_i32_0 : i32, i32
  }
  func.func @transform_8(%arg0: i32, %arg1: i32) -> (i32, i32, i32) {
    %c0_i32 = arith.constant 0 : i32
    %c0_i32_0 = arith.constant 0 : i32
    %c0_i32_1 = arith.constant 0 : i32
    %c0_i32_2 = arith.constant 0 : i32
    return %c0_i32, %c0_i32_0, %c0_i32_1 : i32, i32, i32
  }
  func.func @transform_9(%arg0: i32, %arg1: i32) -> (i32, i32) {
    %c0_i32 = arith.constant 0 : i32
    %c0_i32_0 = arith.constant 0 : i32
    %c0_i32_1 = arith.constant 0 : i32
    return %c0_i32, %c0_i32_0 : i32, i32
  }
  func.func @transform_10(%arg0: i32, %arg1: i32) -> (i32, i32) {
    %c0_i32 = arith.constant 0 : i32
    %c0_i32_0 = arith.constant 0 : i32
    %c0_i32_1 = arith.constant 0 : i32
    return %c0_i32, %c0_i32_0 : i32, i32
  }
  func.func @transform_11(%arg0: i32, %arg1: i32) -> (i32, i32, i32) {
    %0 = arith.muli %arg1, %arg0 : i32
    %c0_i32 = arith.constant 0 : i32
    %c0_i32_0 = arith.constant 0 : i32
    %c0_i32_1 = arith.constant 0 : i32
    return %0, %c0_i32, %c0_i32_0 : i32, i32, i32
  }
}

</mosaic_0001>

<llo_original>
// kernel: regressor_forward.1
$region0: #{regressor_forward.1}
  #allocation0 [shape = 'u32[]', space=smem, size = 0x4, offset = 0x4, fixed_abs, tag = 'smem constant byte address 0x4 - core index']
  #allocation1 [shape = 'u32[144,128]{1,0:T(1,128)}', space=vmem, size = 0x12000, scoped, tag = 'internal scratch']
  #allocation2 [shape = 'f32[2,21,235]{2,1,0:T(8,128)}', space=vmem, size = 0xc000, scoped, tag = 'scratch operand']
  #allocation3 [shape = 'f32[21,1]{1,0:T(8,128)}', space=vmem, size = 0x3000, scoped, tag = 'scratch operand']
  #allocation4 [shape = 'f32[21,1]{1,0:T(8,128)}', space=vmem, size = 0x3000, scoped, tag = 'scratch operand']
  %s0 = inlined_call_operand.vmem [shape: bf16[2,21,256], index: 0, kind: input, shape index: {}]
  %s1 = inlined_call_operand.vmem [shape: bf16[2,235,256], index: 1, kind: input, shape index: {}]
  %s2 = inlined_call_operand.vmem [shape: f32[21,1], index: 2, kind: input, shape index: {}]
  %s3 = inlined_call_operand.vmem [shape: f32[21,1], index: 3, kind: input, shape index: {}]
  %s4 = inlined_call_operand.vmem [shape: bf16[235,132], index: 4, kind: input, shape index: {}]
  %s5 = inlined_call_operand.vmem [shape: bf16[4,235], index: 5, kind: input, shape index: {}]
  %s6 = inlined_call_operand.vmem [shape: f32[1,128], index: 6, kind: input, shape index: {}]
  %s7 = inlined_call_operand.vmem [shape: f32[21,21], index: 7, kind: input, shape index: {}]
  %s8 = inlined_call_operand.vmem [shape: f32[3,21,21], index: 8, kind: input, shape index: {}]
  %s9 = inlined_call_operand.vmem [shape: bf16[128,384], index: 9, kind: input, shape index: {}]
  %s10 = inlined_call_operand.vmem [shape: f32[1,128], index: 10, kind: input, shape index: {}]
  %s11 = inlined_call_operand.vmem [shape: f32[2,21,128], index: 11, kind: output, shape index: {}]
  %s12 = sld [smem:[#allocation0]]
  $region89: #{regressor_forward.1} parent=0
    _
  %s14 = ssub.s32 1, %s12
  %s15 = scalar_select 0, %s14, %s12
  loop: start=0, step=1, limit=6
  $region2: #{regressor_forward.1} parent=0 // loop_pre_header
    _
  $region3: #{regressor_forward.1} parent=0 // loop_header
    %s17 = sphi 0, %s21
    %p18 = scmp.ge.s32.totalorder %s17, 6
    %s24 = sphi 0, %s36
    %s25 = sphi 0, %s32
    %s26 = sphi 0, %s24
    %s27 = sphi 0, %s25
    %s28 = sphi 0, %s26
    %s29 = sphi 0, %s27
    %s45 = sphi 0, %s47
    %s48 = sphi 0, %s45
    %s49 = sphi 0, %s48
    %s65 = sphi 0, %s49
    %s77 = sphi 0, %s79
    %s80 = sphi 0, %s77
    %s81 = sphi 0, %s80
    %s97 = sphi 0, %s81
    %s101 = sphi 0, %s101
    %s103 = sphi 0, %s101
    %s104 = sphi 0, %s103
    %s118 = sphi 0, %s104
    %s122 = sphi 0, %s122
    %s124 = sphi 0, %s122
    %s125 = sphi 0, %s124
    %s139 = sphi 0, %s125
    %s143 = sphi 0, %s143
    %s145 = sphi 0, %s143
    %s146 = sphi 0, %s145
    %s160 = sphi 0, %s146
    %s164 = sphi 0, %s164
    %s166 = sphi 0, %s164
    %s167 = sphi 0, %s166
    %s181 = sphi 0, %s167
    %s185 = sphi 0, %s185
    %s187 = sphi 0, %s185
    %s188 = sphi 0, %s187
    %s202 = sphi 0, %s188
    %s206 = sphi 0, %s206
    %s208 = sphi 0, %s206
    %s209 = sphi 0, %s208
    %s223 = sphi 0, %s209
    %s227 = sphi 0, %s227
    %s229 = sphi 0, %s227
    %s230 = sphi 0, %s229
    %s244 = sphi 0, %s230
    %s248 = sphi 0, %s248
    %s250 = sphi 0, %s248
    %s251 = sphi 0, %s250
    %s265 = sphi 0, %s251
    %s269 = sphi 0, %s269
    %s271 = sphi 0, %s269
    %s272 = sphi 0, %s271
    %s286 = sphi 0, %s272
    %s294 = sphi 0, %s296
    %s297 = sphi 0, %s294
    %s298 = sphi 0, %s297
    %s314 = sphi 0, %s298
  $region4: #{regressor_forward.1} parent=0 // loop_header_branch
    %20 = sbr.rel (%p18) target = $region8
  $region5: #{regressor_forward.1} parent=0 // loop_body
    %s22 = ssub.s32 %s17, 1
    %s23 = ssub.s32 %s17, 2
    %s30 = sadd.s32 1, %s25
    %p31 = scmp.ge.s32.totalorder %s30, 2
    %s32 = scalar_select %p31, 0, %s30
    %s33 = sadd.s32 1, %s24
    %s34 = scalar_select %p31, %s33, %s24
    %p35 = scmp.ge.s32.totalorder %s34, 2
    %s36 = scalar_select %p35, 0, %s34
    %s37 = ssub.s32 1, %s24
    %s38 = smul.u32 %s25, %s37
    %s39 = sadd.s32 %s38, %s24
    %s40 = ssub.s32 1, %s36
    %s41 = smul.u32 %s32, %s40
    %s42 = sadd.s32 %s41, %s36
    %s43 = ssub.s32 %s39, %s42
    %p44 = scmp.eq.s32.totalorder %s43, 0
    %s46 = sadd.s32 %s45, 1
    %s47 = scalar_select %p44, %s45, %s46
    %p50 = pneg %p44
    %p51 = scmp.eq.s32.totalorder %s17, 3
    %p52 = por %p50, %p51
    %p53 = scmp.ne.s32.totalorder %s45, %s48
    %p54 = scmp.eq.s32.totalorder %s17, 0
    %p55 = por %p53, %p54
    %p56 = scmp.ne.s32.totalorder %s45, %s48
    %p57 = scmp.eq.s32.totalorder %s22, 3
    %p58 = por %p56, %p57
    %p59 = scmp.ne.s32.totalorder %s48, %s49
    %p60 = scmp.eq.s32.totalorder %s22, 0
    %p61 = por %p59, %p60
    %p62 = scmp.ne.s32.totalorder %s48, %s49
    %p63 = scmp.eq.s32.totalorder %s23, 3
    %p64 = por %p62, %p63
    %p66 = scmp.ne.s32.totalorder %s49, %s65
    %p67 = scmp.eq.s32.totalorder %s23, 0
    %p68 = por %p66, %p67
    %s69 = ssub.s32 1, %s24
    %s70 = smul.u32 %s25, %s69
    %s71 = sadd.s32 %s70, %s24
    %s72 = ssub.s32 1, %s36
    %s73 = smul.u32 %s32, %s72
    %s74 = sadd.s32 %s73, %s36
    %s75 = ssub.s32 %s71, %s74
    %p76 = scmp.eq.s32.totalorder %s75, 0
    %s78 = sadd.s32 %s77, 1
    %s79 = scalar_select %p76, %s77, %s78
    %p82 = pneg %p76
    %p83 = scmp.eq.s32.totalorder %s17, 3
    %p84 = por %p82, %p83
    %p85 = scmp.ne.s32.totalorder %s77, %s80
    %p86 = scmp.eq.s32.totalorder %s17, 0
    %p87 = por %p85, %p86
    %p88 = scmp.ne.s32.totalorder %s77, %s80
    %p89 = scmp.eq.s32.totalorder %s22, 3
    %p90 = por %p88, %p89
    %p91 = scmp.ne.s32.totalorder %s80, %s81
    %p92 = scmp.eq.s32.totalorder %s22, 0
    %p93 = por %p91, %p92
    %p94 = scmp.ne.s32.totalorder %s80, %s81
    %p95 = scmp.eq.s32.totalorder %s23, 3
    %p96 = por %p94, %p95
    %p98 = scmp.ne.s32.totalorder %s81, %s97
    %p99 = scmp.eq.s32.totalorder %s23, 0
    %p100 = por %p98, %p99
    %s102 = sadd.s32 %s101, 1
    %p105 = scmp.eq.s32.totalorder %s17, 3
    %p106 = scmp.ne.s32.totalorder %s101, %s103
    %p107 = scmp.eq.s32.totalorder %s17, 0
    %p108 = por %p106, %p107
    %p109 = scmp.ne.s32.totalorder %s101, %s103
    %p110 = scmp.eq.s32.totalorder %s22, 3
    %p111 = por %p109, %p110
    %p112 = scmp.ne.s32.totalorder %s103, %s104
    %p113 = scmp.eq.s32.totalorder %s22, 0
    %p114 = por %p112, %p113
    %p115 = scmp.ne.s32.totalorder %s103, %s104
    %p116 = scmp.eq.s32.totalorder %s23, 3
    %p117 = por %p115, %p116
    %p119 = scmp.ne.s32.totalorder %s104, %s118
    %p120 = scmp.eq.s32.totalorder %s23, 0
    %p121 = por %p119, %p120
    %s123 = sadd.s32 %s122, 1
    %p126 = scmp.eq.s32.totalorder %s17, 3
    %p127 = scmp.ne.s32.totalorder %s122, %s124
    %p128 = scmp.eq.s32.totalorder %s17, 0
    %p129 = por %p127, %p128
    %p130 = scmp.ne.s32.totalorder %s122, %s124
    %p131 = scmp.eq.s32.totalorder %s22, 3
    %p132 = por %p130, %p131
    %p133 = scmp.ne.s32.totalorder %s124, %s125
    %p134 = scmp.eq.s32.totalorder %s22, 0
    %p135 = por %p133, %p134
    %p136 = scmp.ne.s32.totalorder %s124, %s125
    %p137 = scmp.eq.s32.totalorder %s23, 3
    %p138 = por %p136, %p137
    %p140 = scmp.ne.s32.totalorder %s125, %s139
    %p141 = scmp.eq.s32.totalorder %s23, 0
    %p142 = por %p140, %p141
    %s144 = sadd.s32 %s143, 1
    %p147 = scmp.eq.s32.totalorder %s17, 3
    %p148 = scmp.ne.s32.totalorder %s143, %s145
    %p149 = scmp.eq.s32.totalorder %s17, 0
    %p150 = por %p148, %p149
    %p151 = scmp.ne.s32.totalorder %s143, %s145
    %p152 = scmp.eq.s32.totalorder %s22, 3
    %p153 = por %p151, %p152
    %p154 = scmp.ne.s32.totalorder %s145, %s146
    %p155 = scmp.eq.s32.totalorder %s22, 0
    %p156 = por %p154, %p155
    %p157 = scmp.ne.s32.totalorder %s145, %s146
    %p158 = scmp.eq.s32.totalorder %s23, 3
    %p159 = por %p157, %p158
    %p161 = scmp.ne.s32.totalorder %s146, %s160
    %p162 = scmp.eq.s32.totalorder %s23, 0
    %p163 = por %p161, %p162
    %s165 = sadd.s32 %s164, 1
    %p168 = scmp.eq.s32.totalorder %s17, 3
    %p169 = scmp.ne.s32.totalorder %s164, %s166
    %p170 = scmp.eq.s32.totalorder %s17, 0
    %p171 = por %p169, %p170
    %p172 = scmp.ne.s32.totalorder %s164, %s166
    %p173 = scmp.eq.s32.totalorder %s22, 3
    %p174 = por %p172, %p173
    %p175 = scmp.ne.s32.totalorder %s166, %s167
    %p176 = scmp.eq.s32.totalorder %s22, 0
    %p177 = por %p175, %p176
    %p178 = scmp.ne.s32.totalorder %s166, %s167
    %p179 = scmp.eq.s32.totalorder %s23, 3
    %p180 = por %p178, %p179
    %p182 = scmp.ne.s32.totalorder %s167, %s181
    %p183 = scmp.eq.s32.totalorder %s23, 0
    %p184 = por %p182, %p183
    %s186 = sadd.s32 %s185, 1
    %p189 = scmp.eq.s32.totalorder %s17, 3
    %p190 = scmp.ne.s32.totalorder %s185, %s187
    %p191 = scmp.eq.s32.totalorder %s17, 0
    %p192 = por %p190, %p191
    %p193 = scmp.ne.s32.totalorder %s185, %s187
    %p194 = scmp.eq.s32.totalorder %s22, 3
    %p195 = por %p193, %p194
    %p196 = scmp.ne.s32.totalorder %s187, %s188
    %p197 = scmp.eq.s32.totalorder %s22, 0
    %p198 = por %p196, %p197
    %p199 = scmp.ne.s32.totalorder %s187, %s188
    %p200 = scmp.eq.s32.totalorder %s23, 3
    %p201 = por %p199, %p200
    %p203 = scmp.ne.s32.totalorder %s188, %s202
    %p204 = scmp.eq.s32.totalorder %s23, 0
    %p205 = por %p203, %p204
    %s207 = sadd.s32 %s206, 1
    %p210 = scmp.eq.s32.totalorder %s17, 3
    %p211 = scmp.ne.s32.totalorder %s206, %s208
    %p212 = scmp.eq.s32.totalorder %s17, 0
    %p213 = por %p211, %p212
    %p214 = scmp.ne.s32.totalorder %s206, %s208
    %p215 = scmp.eq.s32.totalorder %s22, 3
    %p216 = por %p214, %p215
    %p217 = scmp.ne.s32.totalorder %s208, %s209
    %p218 = scmp.eq.s32.totalorder %s22, 0
    %p219 = por %p217, %p218
    %p220 = scmp.ne.s32.totalorder %s208, %s209
    %p221 = scmp.eq.s32.totalorder %s23, 3
    %p222 = por %p220, %p221
    %p224 = scmp.ne.s32.totalorder %s209, %s223
    %p225 = scmp.eq.s32.totalorder %s23, 0
    %p226 = por %p224, %p225
    %s228 = sadd.s32 %s227, 1
    %p231 = scmp.eq.s32.totalorder %s17, 3
    %p232 = scmp.ne.s32.totalorder %s227, %s229
    %p233 = scmp.eq.s32.totalorder %s17, 0
    %p234 = por %p232, %p233
    %p235 = scmp.ne.s32.totalorder %s227, %s229
    %p236 = scmp.eq.s32.totalorder %s22, 3
    %p237 = por %p235, %p236
    %p238 = scmp.ne.s32.totalorder %s229, %s230
    %p239 = scmp.eq.s32.totalorder %s22, 0
    %p240 = por %p238, %p239
    %p241 = scmp.ne.s32.totalorder %s229, %s230
    %p242 = scmp.eq.s32.totalorder %s23, 3
    %p243 = por %p241, %p242
    %p245 = scmp.ne.s32.totalorder %s230, %s244
    %p246 = scmp.eq.s32.totalorder %s23, 0
    %p247 = por %p245, %p246
    %s249 = sadd.s32 %s248, 1
    %p252 = scmp.eq.s32.totalorder %s17, 3
    %p253 = scmp.ne.s32.totalorder %s248, %s250
    %p254 = scmp.eq.s32.totalorder %s17, 0
    %p255 = por %p253, %p254
    %p256 = scmp.ne.s32.totalorder %s248, %s250
    %p257 = scmp.eq.s32.totalorder %s22, 3
    %p258 = por %p256, %p257
    %p259 = scmp.ne.s32.totalorder %s250, %s251
    %p260 = scmp.eq.s32.totalorder %s22, 0
    %p261 = por %p259, %p260
    %p262 = scmp.ne.s32.totalorder %s250, %s251
    %p263 = scmp.eq.s32.totalorder %s23, 3
    %p264 = por %p262, %p263
    %p266 = scmp.ne.s32.totalorder %s251, %s265
    %p267 = scmp.eq.s32.totalorder %s23, 0
    %p268 = por %p266, %p267
    %s270 = sadd.s32 %s269, 1
    %p273 = scmp.eq.s32.totalorder %s17, 3
    %p274 = scmp.ne.s32.totalorder %s269, %s271
    %p275 = scmp.eq.s32.totalorder %s17, 0
    %p276 = por %p274, %p275
    %p277 = scmp.ne.s32.totalorder %s269, %s271
    %p278 = scmp.eq.s32.totalorder %s22, 3
    %p279 = por %p277, %p278
    %p280 = scmp.ne.s32.totalorder %s271, %s272
    %p281 = scmp.eq.s32.totalorder %s22, 0
    %p282 = por %p280, %p281
    %p283 = scmp.ne.s32.totalorder %s271, %s272
    %p284 = scmp.eq.s32.totalorder %s23, 3
    %p285 = por %p283, %p284
    %p287 = scmp.ne.s32.totalorder %s272, %s286
    %p288 = scmp.eq.s32.totalorder %s23, 0
    %p289 = por %p287, %p288
    %s290 = smul.u32 %s25, %s24
    %s291 = smul.u32 %s32, %s36
    %s292 = ssub.s32 %s290, %s291
    %p293 = scmp.eq.s32.totalorder %s292, 0
    %s295 = sadd.s32 %s294, 1
    %s296 = scalar_select %p293, %s294, %s295
    %p299 = pneg %p293
    %p300 = scmp.eq.s32.totalorder %s17, 3
    %p301 = por %p299, %p300
    %p302 = scmp.ne.s32.totalorder %s294, %s297
    %p303 = scmp.eq.s32.totalorder %s17, 0
    %p304 = por %p302, %p303
    %p305 = scmp.ne.s32.totalorder %s294, %s297
    %p306 = scmp.eq.s32.totalorder %s22, 3
    %p307 = por %p305, %p306
    %p308 = scmp.ne.s32.totalorder %s297, %s298
    %p309 = scmp.eq.s32.totalorder %s22, 0
    %p310 = por %p308, %p309
    %p311 = scmp.ne.s32.totalorder %s297, %s298
    %p312 = scmp.eq.s32.totalorder %s23, 3
    %p313 = por %p311, %p312
    %p315 = scmp.ne.s32.totalorder %s298, %s314
    %p316 = scmp.eq.s32.totalorder %s23, 0
    %p317 = por %p315, %p316
    %p318 = scmp.le.s32.totalorder 1, %s17
    %p319 = scmp.lt.s32.totalorder %s17, 5
    %p320 = pnand %p318, %p319
    %p321 = pneg %p320
    // Predicated region
    $region9: #{regressor_forward.1} parent=5 // pred_check
      _
    $region10: #{regressor_forward.1} parent=5 // pred_check_branch
      %323 = sbr.rel (%p320) target = $region12
    $region11: #{regressor_forward.1} parent=5 // pred_region
      %s324 = ssub.s32 %s17, 1
      // Predicated region
      $region13: #{regressor_forward.1} parent=11 // pred_check
        %p325 = pneg %p114
      $region14: #{regressor_forward.1} parent=11 // pred_check_branch
        %327 = sbr.rel (%p325) target = $region16
      $region15: #{regressor_forward.1} parent=11 // pred_region
        _
      $region16: #{regressor_forward.1} parent=11 // pred_fallthru
        _
      // Predicated region
      $region17: #{regressor_forward.1} parent=11 // pred_check
        %p328 = pneg %p135
      $region18: #{regressor_forward.1} parent=11 // pred_check_branch
        %330 = sbr.rel (%p328) target = $region20
      $region19: #{regressor_forward.1} parent=11 // pred_region
        _
      $region20: #{regressor_forward.1} parent=11 // pred_fallthru
        _
      // Predicated region
      $region21: #{regressor_forward.1} parent=11 // pred_check
        %p331 = pneg %p156
      $region22: #{regressor_forward.1} parent=11 // pred_check_branch
        %333 = sbr.rel (%p331) target = $region24
      $region23: #{regressor_forward.1} parent=11 // pred_region
        _
      $region24: #{regressor_forward.1} parent=11 // pred_fallthru
        _
      // Predicated region
      $region25: #{regressor_forward.1} parent=11 // pred_check
        %p334 = pneg %p177
      $region26: #{regressor_forward.1} parent=11 // pred_check_branch
        %336 = sbr.rel (%p334) target = $region28
      $region27: #{regressor_forward.1} parent=11 // pred_region
        _
      $region28: #{regressor_forward.1} parent=11 // pred_fallthru
        _
      // Predicated region
      $region29: #{regressor_forward.1} parent=11 // pred_check
        %p337 = pneg %p198
      $region30: #{regressor_forward.1} parent=11 // pred_check_branch
        %339 = sbr.rel (%p337) target = $region32
      $region31: #{regressor_forward.1} parent=11 // pred_region
        _
      $region32: #{regressor_forward.1} parent=11 // pred_fallthru
        _
      // Predicated region
      $region33: #{regressor_forward.1} parent=11 // pred_check
        %p340 = pneg %p219
      $region34: #{regressor_forward.1} parent=11 // pred_check_branch
        %342 = sbr.rel (%p340) target = $region36
      $region35: #{regressor_forward.1} parent=11 // pred_region
        _
      $region36: #{regressor_forward.1} parent=11 // pred_fallthru
        _
      // Predicated region
      $region37: #{regressor_forward.1} parent=11 // pred_check
        %p343 = pneg %p240
      $region38: #{regressor_forward.1} parent=11 // pred_check_branch
        %345 = sbr.rel (%p343) target = $region40
      $region39: #{regressor_forward.1} parent=11 // pred_region
        _
      $region40: #{regressor_forward.1} parent=11 // pred_fallthru
        _
      // Predicated region
      $region41: #{regressor_forward.1} parent=11 // pred_check
        %p346 = pneg %p261
      $region42: #{regressor_forward.1} parent=11 // pred_check_branch
        %348 = sbr.rel (%p346) target = $region44
      $region43: #{regressor_forward.1} parent=11 // pred_region
        _
      $region44: #{regressor_forward.1} parent=11 // pred_fallthru
        _
      // Predicated region
      $region45: #{regressor_forward.1} parent=11 // pred_check
        %p349 = pneg %p282
      $region46: #{regressor_forward.1} parent=11 // pred_check_branch
        %351 = sbr.rel (%p349) target = $region48
      $region47: #{regressor_forward.1} parent=11 // pred_region
        _
      $region48: #{regressor_forward.1} parent=11 // pred_fallthru
        _
    $region12: #{regressor_forward.1} parent=5 // pred_fallthru
      _
    %p352 = scmp.lt.s32.totalorder %s17, 4
    // Predicated region
    $region49: #{regressor_forward.1} parent=5 // pred_check
      %p353 = pneg %p352
    $region50: #{regressor_forward.1} parent=5 // pred_check_branch
      %355 = sbr.rel (%p353) target = $region52
    $region51: #{regressor_forward.1} parent=5 // pred_region
      // Predicated region
      $region53: #{regressor_forward.1} parent=51 // pred_check
        %p356 = pneg %p55
      $region54: #{regressor_forward.1} parent=51 // pred_check_branch
        %358 = sbr.rel (%p356) target = $region56
      $region55: #{regressor_forward.1} parent=51 // pred_region
        %s359 = ssub.s32 1, %s24
        %s360 = smul.u32 %s25, %s359
        %s361 = sadd.s32 %s360, %s24
        %p362 = scmp.lt.s32.totalorder %s361, 1
        %s363 = scalar_select %p362, %s361, 1
        %s364 = smul.addr %s363, 6
        %s365 = smul.addr %s364, 4
        %s366 = scalar_lea.vmem %s0, %s365
        %s367 = ssub.s32 1, %s24
        %s368 = smul.u32 %s25, %s367
        %s369 = sadd.s32 %s368, %s24
      $region56: #{regressor_forward.1} parent=51 // pred_fallthru
        _
      // Predicated region
      $region57: #{regressor_forward.1} parent=51 // pred_check
        %p370 = pneg %p87
      $region58: #{regressor_forward.1} parent=51 // pred_check_branch
        %372 = sbr.rel (%p370) target = $region60
      $region59: #{regressor_forward.1} parent=51 // pred_region
        %s373 = ssub.s32 1, %s24
        %s374 = smul.u32 %s25, %s373
        %s375 = sadd.s32 %s374, %s24
        %p376 = scmp.lt.s32.totalorder %s375, 1
        %s377 = scalar_select %p376, %s375, 1
        %s378 = smul.addr %s377, 60
        %s379 = smul.addr %s378, 4
        %s380 = scalar_lea.vmem %s1, %s379
        %s381 = ssub.s32 1, %s24
        %s382 = smul.u32 %s25, %s381
        %s383 = sadd.s32 %s382, %s24
      $region60: #{regressor_forward.1} parent=51 // pred_fallthru
        _
    $region52: #{regressor_forward.1} parent=5 // pred_fallthru
      _
    %p384 = scmp.le.s32.totalorder 1, %s17
    %p385 = scmp.lt.s32.totalorder %s17, 5
    %p386 = pnand %p384, %p385
    %p387 = pneg %p386
    // Predicated region
    $region61: #{regressor_forward.1} parent=5 // pred_check
      _
    $region62: #{regressor_forward.1} parent=5 // pred_check_branch
      %389 = sbr.rel (%p386) target = $region64
    $region63: #{regressor_forward.1} parent=5 // pred_region
      %s390 = ssub.s32 %s17, 1
      %s391 = ssub.s32 1, %s26
      %s392 = smul.u32 %s27, %s391
      %s393 = sadd.s32 %s392, %s26
      %p394 = scmp.lt.s32.totalorder %s393, 1
      %s395 = scalar_select %p394, %s393, 1
      %s396 = smul.addr %s395, 6
      %s397 = smul.addr %s396, 4
      %s398 = scalar_lea.vmem %s0, %s397
      %p399 = pneg %p61
      %p400 = pneg %p58
      %s401 = ssub.s32 1, %s26
      %s402 = smul.u32 %s27, %s401
      %s403 = sadd.s32 %s402, %s26
      %p404 = scmp.lt.s32.totalorder %s403, 1
      %s405 = scalar_select %p404, %s403, 1
      %s406 = smul.addr %s405, 60
      %s407 = smul.addr %s406, 4
      %s408 = scalar_lea.vmem %s1, %s407
      %p409 = pneg %p93
      %p410 = pneg %p90
      %p411 = pneg %p114
      %p412 = pneg %p111
      %p413 = pneg %p135
      %p414 = pneg %p132
      %p415 = pneg %p156
      %p416 = pneg %p153
      %p417 = pneg %p177
      %p418 = pneg %p174
      %p419 = pneg %p198
      %p420 = pneg %p195
      %p421 = pneg %p219
      %p422 = pneg %p216
      %p423 = pneg %p240
      %p424 = pneg %p237
      %p425 = pneg %p261
      %p426 = pneg %p258
      %p427 = pneg %p282
      %p428 = pneg %p279
      %p429 = pneg %p310
      %p430 = pneg %p307
      %s431 = smul.u32 %s27, %s26
      %p432 = scmp.lt.s32.totalorder %s431, 1
      %s433 = scalar_select %p432, %s431, 1
      %s434 = smul.addr %s433, 3
      %s435 = smul.addr %s434, 8
      %s436 = scalar_lea.vmem %s11, %s435
      %s437 = ssub.s32 1, %s26
      %s438 = smul.u32 %s27, %s437
      %s439 = sadd.s32 %s438, %s26
      %p440 = scmp.lt.s32.totalorder %s439, 1
      %s441 = scalar_select %p440, %s439, 1
      %s442 = smul.addr %s441, 6
      %s443 = smul.addr %s442, 4
      %s444 = scalar_lea.vmem %s0, %s443
      %s445 = ssub.s32 1, %s26
      %s446 = smul.u32 %s27, %s445
      %s447 = sadd.s32 %s446, %s26
      %s448 = ssub.s32 1, %s26
      %s449 = smul.u32 %s27, %s448
      %s450 = sadd.s32 %s449, %s26
      %p451 = scmp.lt.s32.totalorder %s450, 1
      %s452 = scalar_select %p451, %s450, 1
      %s453 = smul.addr %s452, 60
      %s454 = smul.addr %s453, 4
      %s455 = scalar_lea.vmem %s1, %s454
      %s456 = ssub.s32 1, %s26
      %s457 = smul.u32 %s27, %s456
      %s458 = sadd.s32 %s457, %s26
      %s459 = smul.u32 %s27, %s26
      %p460 = scmp.lt.s32.totalorder %s459, 1
      %s461 = scalar_select %p460, %s459, 1
      %s462 = smul.addr %s461, 3
      %s463 = smul.addr %s462, 8
      %s464 = scalar_lea.vmem %s11, %s463
      %s465 = smul.u32 %s27, %s26
      %p467 = scmp.eq.s32.totalorder %s26, 0
      %p468 = scmp.eq.s32.totalorder %s27, 0
      %p469 = pnand %p467, %p468
      %p470 = pneg %p469
      // Predicated region
      $region65: #{regressor_forward.1} parent=63 // pred_check
        _
      $region66: #{regressor_forward.1} parent=63 // pred_check_branch
        %472 = sbr.rel (%p469) target = $region68
      $region67: #{regressor_forward.1} parent=63 // pred_region
        %vm473 = vcmask 7168
        %474 = vst.msk [vmem:[#allocation3] sm:$0xff] %vm473, 0.0
        %475 = vst.msk [vmem:[#allocation3 + $0x8] sm:$0xff] %vm473, 0.0
        %vm476 = vcmask 4096
        %477 = vst.msk [vmem:[#allocation3 + $0x10] sm:$0x1f] %vm476, 0.0
        %478 = vst.msk [vmem:[#allocation4] sm:$0xff] %vm473, 0.0
        %479 = vst.msk [vmem:[#allocation4 + $0x8] sm:$0xff] %vm473, 0.0
        %480 = vst.msk [vmem:[#allocation4 + $0x10] sm:$0x1f] %vm476, 0.0
      $region68: #{regressor_forward.1} parent=63 // pred_fallthru
        _
      // Predicated region
      $region69: #{regressor_forward.1} parent=63 // pred_check
        %p481 = pneg %p467
      $region70: #{regressor_forward.1} parent=63 // pred_check_branch
        %483 = sbr.rel (%p481) target = $region72
      $region71: #{regressor_forward.1} parent=63 // pred_region
        %v484 = vld [vmem:[%s444] sm:$0xff]
        %v485 = vld [vmem:[%s444 + $0x8] sm:$0xff]
        %v486 = vld [vmem:[%s444 + $0x10] sm:$0x77]
        %v487 = vld [vmem:[%s455] sm:$0xff]
        %v488 = vld [vmem:[%s455 + $0x8] sm:$0xff]
        %v489 = vld [vmem:[%s455 + $0x10] sm:$0xff]
        %v490 = vld [vmem:[%s455 + $0x18] sm:$0xff]
        %v491 = vld [vmem:[%s455 + $0x20] sm:$0xff]
        %v492 = vld [vmem:[%s455 + $0x28] sm:$0xff]
        %v493 = vld [vmem:[%s455 + $0x30] sm:$0xff]
        %v494 = vld [vmem:[%s455 + $0x38] sm:$0xff]
        %v495 = vld [vmem:[%s455 + $0x40] sm:$0xff]
        %v496 = vld [vmem:[%s455 + $0x48] sm:$0xff]
        %v497 = vld [vmem:[%s455 + $0x50] sm:$0xff]
        %v498 = vld [vmem:[%s455 + $0x58] sm:$0xff]
        %v499 = vld [vmem:[%s455 + $0x60] sm:$0xff]
        %v500 = vld [vmem:[%s455 + $0x68] sm:$0xff]
        %v501 = vld [vmem:[%s455 + $0x70] sm:$0xff]
        %v502 = vld [vmem:[%s455 + $0x78] sm:$0xff]
        %v503 = vld [vmem:[%s455 + $0x80] sm:$0xff]
        %v504 = vld [vmem:[%s455 + $0x88] sm:$0xff]
        %v505 = vld [vmem:[%s455 + $0x90] sm:$0xff]
        %v506 = vld [vmem:[%s455 + $0x98] sm:$0xff]
        %v507 = vld [vmem:[%s455 + $0xa0] sm:$0xff]
        %v508 = vld [vmem:[%s455 + $0xa8] sm:$0xff]
        %v509 = vld [vmem:[%s455 + $0xb0] sm:$0xff]
        %v510 = vld [vmem:[%s455 + $0xb8] sm:$0xff]
        %v511 = vld [vmem:[%s455 + $0xc0] sm:$0xff]
        %v512 = vld [vmem:[%s455 + $0xc8] sm:$0xff]
        %v513 = vld [vmem:[%s455 + $0xd0] sm:$0xff]
        %v514 = vld [vmem:[%s455 + $0xd8] sm:$0xff]
        %v515 = vld [vmem:[%s455 + $0xe0] sm:$0xff]
        %v516 = vld [vmem:[%s455 + $0xe8] sm:$0x33]
        %v520 = vunpack.c.l.b16 %v484
        %v521 = vunpack.c.h.b16 %v484
        %v522 = vunpack.c.l.b16 %v485
        %v523 = vunpack.c.h.b16 %v485
        %v524 = vunpack.c.l.b16 %v486
        %v525 = vunpack.c.h.b16 %v486
        %v526 = vpack.c.b16 %v522, %v520
        %v527 = vpack.c.b16 %v523, %v521
        %v528 = vpack.c.b16 %v524, %v524
        %v529 = vpack.c.b16 %v525, %v525
        %v564 = vunpack.c.l.b16 %v487
        %v565 = vunpack.c.h.b16 %v487
        %v566 = vunpack.c.l.b16 %v488
        %v567 = vunpack.c.h.b16 %v488
        %v568 = vunpack.c.l.b16 %v489
        %v569 = vunpack.c.h.b16 %v489
        %v570 = vunpack.c.l.b16 %v490
        %v571 = vunpack.c.h.b16 %v490
        %v572 = vunpack.c.l.b16 %v491
        %v573 = vunpack.c.h.b16 %v491
        %v574 = vunpack.c.l.b16 %v492
        %v575 = vunpack.c.h.b16 %v492
        %v576 = vunpack.c.l.b16 %v493
        %v577 = vunpack.c.h.b16 %v493
        %v578 = vunpack.c.l.b16 %v494
        %v579 = vunpack.c.h.b16 %v494
        %v580 = vunpack.c.l.b16 %v495
        %v581 = vunpack.c.h.b16 %v495
        %v582 = vunpack.c.l.b16 %v496
        %v583 = vunpack.c.h.b16 %v496
        %v584 = vunpack.c.l.b16 %v497
        %v585 = vunpack.c.h.b16 %v497
        %v586 = vunpack.c.l.b16 %v498
        %v587 = vunpack.c.h.b16 %v498
        %v588 = vunpack.c.l.b16 %v499
        %v589 = vunpack.c.h.b16 %v499
        %v590 = vunpack.c.l.b16 %v500
        %v591 = vunpack.c.h.b16 %v500
        %v592 = vunpack.c.l.b16 %v501
        %v593 = vunpack.c.h.b16 %v501
        %v594 = vunpack.c.l.b16 %v502
        %v595 = vunpack.c.h.b16 %v502
        %v596 = vunpack.c.l.b16 %v503
        %v597 = vunpack.c.h.b16 %v503
        %v598 = vunpack.c.l.b16 %v504
        %v599 = vunpack.c.h.b16 %v504
        %v600 = vunpack.c.l.b16 %v505
        %v601 = vunpack.c.h.b16 %v505
        %v602 = vunpack.c.l.b16 %v506
        %v603 = vunpack.c.h.b16 %v506
        %v604 = vunpack.c.l.b16 %v507
        %v605 = vunpack.c.h.b16 %v507
        %v606 = vunpack.c.l.b16 %v508
        %v607 = vunpack.c.h.b16 %v508
        %v608 = vunpack.c.l.b16 %v509
        %v609 = vunpack.c.h.b16 %v509
        %v610 = vunpack.c.l.b16 %v510
        %v611 = vunpack.c.h.b16 %v510
        %v612 = vunpack.c.l.b16 %v511
        %v613 = vunpack.c.h.b16 %v511
        %v614 = vunpack.c.l.b16 %v512
        %v615 = vunpack.c.h.b16 %v512
        %v616 = vunpack.c.l.b16 %v513
        %v617 = vunpack.c.h.b16 %v513
        %v618 = vunpack.c.l.b16 %v514
        %v619 = vunpack.c.h.b16 %v514
        %v620 = vunpack.c.l.b16 %v515
        %v621 = vunpack.c.h.b16 %v515
        %v622 = vunpack.c.l.b16 %v516
        %v623 = vunpack.c.h.b16 %v516
        %v624 = vpack.c.b16 %v566, %v564
        %v625 = vpack.c.b16 %v567, %v565
        %v626 = vpack.c.b16 %v570, %v568
        %v627 = vpack.c.b16 %v571, %v569
        %v628 = vpack.c.b16 %v574, %v572
        %v629 = vpack.c.b16 %v575, %v573
        %v630 = vpack.c.b16 %v578, %v576
        %v631 = vpack.c.b16 %v579, %v577
        %v632 = vpack.c.b16 %v582, %v580
        %v633 = vpack.c.b16 %v583, %v581
        %v634 = vpack.c.b16 %v586, %v584
        %v635 = vpack.c.b16 %v587, %v585
        %v636 = vpack.c.b16 %v590, %v588
        %v637 = vpack.c.b16 %v591, %v589
        %v638 = vpack.c.b16 %v594, %v592
        %v639 = vpack.c.b16 %v595, %v593
        %v640 = vpack.c.b16 %v598, %v596
        %v641 = vpack.c.b16 %v599, %v597
        %v642 = vpack.c.b16 %v602, %v600
        %v643 = vpack.c.b16 %v603, %v601
        %v644 = vpack.c.b16 %v606, %v604
        %v645 = vpack.c.b16 %v607, %v605
        %v646 = vpack.c.b16 %v610, %v608
        %v647 = vpack.c.b16 %v611, %v609
        %v648 = vpack.c.b16 %v614, %v612
        %v649 = vpack.c.b16 %v615, %v613
        %v650 = vpack.c.b16 %v618, %v616
        %v651 = vpack.c.b16 %v619, %v617
        %v652 = vpack.c.b16 %v622, %v620
        %v653 = vpack.c.b16 %v623, %v621
        %684 = vmatprep.subr.bf16.mxu0 %v625
        %685 = vmatpush1.bf16.xpose.msra.mxu0 %v624
        %686 = vmatprep.subr.bf16.mxu0 %v627
        %687 = vmatpush1.bf16.xpose.msra.mxu0 %v626
        %688 = vmatprep.subr.bf16.mxu0 %v629
        %689 = vmatpush1.bf16.xpose.msra.mxu0 %v628
        %690 = vmatprep.subr.bf16.mxu0 %v631
        %691 = vmatpush1.bf16.xpose.msra.mxu0 %v630
        %692 = vmatprep.subr.bf16.mxu0 %v633
        %693 = vmatpush1.bf16.xpose.msra.mxu0 %v632
        %694 = vmatprep.subr.bf16.mxu0 %v635
        %695 = vmatpush1.bf16.xpose.msra.mxu0 %v634
        %696 = vmatprep.subr.bf16.mxu0 %v637
        %697 = vmatpush1.bf16.xpose.msra.mxu0 %v636
        %698 = vmatprep.subr.bf16.mxu0 %v639
        %699 = vmatpush1.bf16.xpose.msra.mxu0 %v638
        %700 = vmatprep.subr.bf16.mxu0 %v641
        %701 = vmatpush1.bf16.xpose.msra.mxu0 %v640
        %702 = vmatprep.subr.bf16.mxu0 %v643
        %703 = vmatpush1.bf16.xpose.msra.mxu0 %v642
        %704 = vmatprep.subr.bf16.mxu0 %v645
        %705 = vmatpush1.bf16.xpose.msra.mxu0 %v644
        %706 = vmatprep.subr.bf16.mxu0 %v647
        %707 = vmatpush1.bf16.xpose.msra.mxu0 %v646
        %708 = vmatprep.subr.bf16.mxu0 %v649
        %709 = vmatpush1.bf16.xpose.msra.mxu0 %v648
        %710 = vmatprep.subr.bf16.mxu0 %v651
        %711 = vmatpush1.bf16.xpose.msra.mxu0 %v650
        %712 = vmatprep.subr.bf16.mxu0 %v653
        %713 = vmatpush1.bf16.xpose.msra.mxu0 %v652
        %714 = vmatprep.subr.bf16.mxu0 0
        %715 = vmatpush1.bf16.xpose.msra.mxu0 0
        %716 = vmatprep.mubr.bf16.mxu0 %v527
        %717 = vmatmul.mubr.bf16.gmra.mrb[0].mxu0 %v526
        %v718 = vpop.f32.mrb[0].mxu0
        %v719 = vadd.f32 0.0, %v718
        %v720 = vpop.f32.mrb[0].mxu0
        %v721 = vadd.f32 0.0, %v720
        %v722 = vpop.f32.mrb[0].mxu0
        %v723 = vadd.f32 0.0, %v722
        %v724 = vpop.f32.mrb[0].mxu0
        %v725 = vadd.f32 0.0, %v724
        %726 = vmatprep.mubr.bf16.mxu0 %v529
        %727 = vmatmul.mubr.bf16.gmra.mrb[0].mxu0 %v528
        %v728 = vpop.f32.mrb[0].mxu0
        %v729 = vadd.f32 0.0, %v728
        %v730 = vpop.f32.mrb[0].mxu0
        %v731 = vadd.f32 0.0, %v730
        %v732 = vpop.f32.mrb[0].mxu0
        %v733 = vpop.f32.mrb[0].mxu0
        %734 = vdwg.mxu0
        %s735 = smul.u32 %s27, 6
        %s736 = smul.addr %s735, 8
        %s737 = scalar_lea.vmem [#allocation2], %s736
        %738 = vst [vmem:[%s737] sm:$0xff] %v719
        %vm739 = vcmask 875520
        %740 = vst.msk [vmem:[%s737 + $0x8] sm:$0xff] %vm739, %v721
        %741 = vst [vmem:[%s737 + $0x10] sm:$0xff] %v723
        %742 = vst.msk [vmem:[%s737 + $0x18] sm:$0xff] %vm739, %v725
        %743 = vst [vmem:[%s737 + $0x20] sm:$0x1f] %v729
        %vm744 = vcmask 872448
        %745 = vst.msk [vmem:[%s737 + $0x28] sm:$0x1f] %vm744, %v731
        %v746 = vld [vmem:[#allocation3] sm:$0xff]
        %v747 = vld [vmem:[#allocation3 + $0x8] sm:$0xff]
        %v748 = vld [vmem:[#allocation3 + $0x10] sm:$0x1f]
        %v749 = vsel %vm739, %v721, 0.0
        %v750 = vadd.f32 %v719, %v749
        %751 = vadd.xlane.f32.xlu0 %v750
        %v752 = vpop.xlane.xlu0 %751
        %v753 = vsel %vm739, %v725, 0.0
        %v754 = vadd.f32 %v723, %v753
        %755 = vadd.xlane.f32.xlu0 %v754
        %v756 = vpop.xlane.xlu0 %755
        %vm757 = vcmask 1044480
        %v758 = vsel %vm757, %v729, 0.0
        %v759 = vsel %vm744, %v731, 0.0
        %v760 = vadd.f32 %v758, %v759
        %761 = vadd.xlane.f32.xlu0 %v760
        %v762 = vpop.xlane.xlu0 %761
        %v763 = vadd.f32 %v746, %v752
        %v764 = vadd.f32 %v747, %v756
        %v765 = vadd.f32 %v748, %v762
        %vm766 = vcmask 7168
        %767 = vst.msk [vmem:[#allocation3] sm:$0xff] %vm766, %v763
        %768 = vst.msk [vmem:[#allocation3 + $0x8] sm:$0xff] %vm766, %v764
        %vm769 = vcmask 4096
        %770 = vst.msk [vmem:[#allocation3 + $0x10] sm:$0x1f] %vm769, %v765
        %v771 = vld [vmem:[#allocation4] sm:$0xff]
        %v772 = vld [vmem:[#allocation4 + $0x8] sm:$0xff]
        %v773 = vld [vmem:[#allocation4 + $0x10] sm:$0x1f]
        %v774 = vmul.f32 %v719, %v719
        %v775 = vmul.f32 %v721, %v721
        %v776 = vmul.f32 %v723, %v723
        %v777 = vmul.f32 %v725, %v725
        %v778 = vmul.f32 %v729, %v729
        %v779 = vmul.f32 %v731, %v731
        %v780 = vsel %vm739, %v775, 0.0
        %v781 = vadd.f32 %v774, %v780
        %782 = vadd.xlane.f32.xlu0 %v781
        %v783 = vpop.xlane.xlu0 %782
        %v784 = vsel %vm739, %v777, 0.0
        %v785 = vadd.f32 %v776, %v784
        %786 = vadd.xlane.f32.xlu0 %v785
        %v787 = vpop.xlane.xlu0 %786
        %v788 = vsel %vm757, %v778, 0.0
        %v789 = vsel %vm744, %v779, 0.0
        %v790 = vadd.f32 %v788, %v789
        %791 = vadd.xlane.f32.xlu0 %v790
        %v792 = vpop.xlane.xlu0 %791
        %v793 = vadd.f32 %v771, %v783
        %v794 = vadd.f32 %v772, %v787
        %v795 = vadd.f32 %v773, %v792
        %796 = vst.msk [vmem:[#allocation4] sm:$0xff] %vm766, %v793
        %797 = vst.msk [vmem:[#allocation4 + $0x8] sm:$0xff] %vm766, %v794
        %798 = vst.msk [vmem:[#allocation4 + $0x10] sm:$0x1f] %vm769, %v795
      $region72: #{regressor_forward.1} parent=63 // pred_fallthru
        _
      %p799 = scmp.eq.s32.totalorder %s26, 1
      // Predicated region
      $region73: #{regressor_forward.1} parent=63 // pred_check
        %p800 = pneg %p799
      $region74: #{regressor_forward.1} parent=63 // pred_check_branch
        %802 = sbr.rel (%p800) target = $region76
      $region75: #{regressor_forward.1} parent=63 // pred_region
        %v803 = vld [vmem:[#allocation3] sm:$0xff]
        %v804 = vld [vmem:[#allocation3 + $0x8] sm:$0xff]
        %v805 = vld [vmem:[#allocation3 + $0x10] sm:$0x1f]
        %v806 = vmul.f32 %v803, 0.0021276595
        %v807 = vmul.f32 %v804, 0.0021276595
        %v808 = vmul.f32 %v805, 0.0021276595
        %v809 = vld [vmem:[#allocation4] sm:$0xff]
        %v810 = vld [vmem:[#allocation4 + $0x8] sm:$0xff]
        %v811 = vld [vmem:[#allocation4 + $0x10] sm:$0x1f]
        %v812 = vmul.f32 %v809, 0.0021276595
        %v813 = vmul.f32 %v810, 0.0021276595
        %v814 = vmul.f32 %v811, 0.0021276595
        %v815 = vmul.f32 %v806, %v806
        %v816 = vmul.f32 %v807, %v807
        %v817 = vmul.f32 %v808, %v808
        %v818 = vsub.f32 %v812, %v815
        %v819 = vsub.f32 %v813, %v816
        %v820 = vsub.f32 %v814, %v817
        %s821 = smul.u32 %s27, 6
        %s822 = smul.addr %s821, 8
        %s823 = scalar_lea.vmem [#allocation2], %s822
        %v824 = vld [vmem:[%s823] sm:$0xff]
        %v825 = vld [vmem:[%s823 + $0x8] sm:$0xff]
        %v826 = vld [vmem:[%s823 + $0x10] sm:$0xff]
        %v827 = vld [vmem:[%s823 + $0x18] sm:$0xff]
        %v828 = vld [vmem:[%s823 + $0x20] sm:$0x1f]
        %v829 = vld [vmem:[%s823 + $0x28] sm:$0x1f]
        %831 = vset.pattern.permute.xlu0 0
        %832 = vperm.xlu0 %831, %v806
        %v833 = vpop.permute.xlu0 %832
        %836 = vset.pattern.permute.xlu0 0
        %837 = vperm.xlu0 %836, %v807
        %v838 = vpop.permute.xlu0 %837
        %841 = vset.pattern.permute.xlu0 0
        %842 = vperm.xlu0 %841, %v808
        %v843 = vpop.permute.xlu0 %842
        %v845 = vsub.f32 %v824, %v833
        %v846 = vsub.f32 %v825, %v833
        %v847 = vsub.f32 %v826, %v838
        %v848 = vsub.f32 %v827, %v838
        %v849 = vsub.f32 %v828, %v843
        %v850 = vsub.f32 %v829, %v843
        %v851 = vadd.f32 %v818, 1e-05
        %v852 = vadd.f32 %v819, 1e-05
        %v853 = vadd.f32 %v820, 1e-05
        %v854 = vrsqrt.pop %v851
        %v855 = vrsqrt.pop %v852
        %v856 = vrsqrt.pop %v853
        %858 = vset.pattern.permute.xlu0 0
        %859 = vperm.xlu0 %858, %v854
        %v860 = vpop.permute.xlu0 %859
        %863 = vset.pattern.permute.xlu0 0
        %864 = vperm.xlu0 %863, %v855
        %v865 = vpop.permute.xlu0 %864
        %868 = vset.pattern.permute.xlu0 0
        %869 = vperm.xlu0 %868, %v856
        %v870 = vpop.permute.xlu0 %869
        %v872 = vmul.f32 %v845, %v860
        %v873 = vmul.f32 %v846, %v860
        %v874 = vmul.f32 %v847, %v865
        %v875 = vmul.f32 %v848, %v865
        %v876 = vmul.f32 %v849, %v870
        %v877 = vmul.f32 %v850, %v870
        %v878 = vld [vmem:[%s2] sm:$0xff]
        %v879 = vld [vmem:[%s2 + $0x8] sm:$0xff]
        %v880 = vld [vmem:[%s2 + $0x10] sm:$0x1f]
        %882 = vset.pattern.permute.xlu0 0
        %883 = vperm.xlu0 %882, %v878
        %v884 = vpop.permute.xlu0 %883
        %887 = vset.pattern.permute.xlu0 0
        %888 = vperm.xlu0 %887, %v879
        %v889 = vpop.permute.xlu0 %888
        %892 = vset.pattern.permute.xlu0 0
        %893 = vperm.xlu0 %892, %v880
        %v894 = vpop.permute.xlu0 %893
        %v896 = vmul.f32 %v872, %v884
        %v897 = vmul.f32 %v873, %v884
        %v898 = vmul.f32 %v874, %v889
        %v899 = vmul.f32 %v875, %v889
        %v900 = vmul.f32 %v876, %v894
        %v901 = vmul.f32 %v877, %v894
        %v902 = vld [vmem:[%s3] sm:$0xff]
        %v903 = vld [vmem:[%s3 + $0x8] sm:$0xff]
        %v904 = vld [vmem:[%s3 + $0x10] sm:$0x1f]
        %906 = vset.pattern.permute.xlu0 0
        %907 = vperm.xlu0 %906, %v902
        %v908 = vpop.permute.xlu0 %907
        %911 = vset.pattern.permute.xlu0 0
        %912 = vperm.xlu0 %911, %v903
        %v913 = vpop.permute.xlu0 %912
        %916 = vset.pattern.permute.xlu0 0
        %917 = vperm.xlu0 %916, %v904
        %v918 = vpop.permute.xlu0 %917
        %v920 = vadd.f32 %v896, %v908
        %v921 = vadd.f32 %v897, %v908
        %v922 = vadd.f32 %v898, %v913
        %v923 = vadd.f32 %v899, %v913
        %v924 = vadd.f32 %v900, %v918
        %v925 = vadd.f32 %v901, %v918
        %v926 = vmul.f32 %v920, 0.1
        %v927 = vmul.f32 %v921, 0.1
        %v928 = vmul.f32 %v922, 0.1
        %v929 = vmul.f32 %v923, 0.1
        %v930 = vmul.f32 %v924, 0.1
        %v931 = vmul.f32 %v925, 0.1
        %v932 = vmax.f32 %v920, %v926
        %v933 = vmax.f32 %v921, %v927
        %v934 = vmax.f32 %v922, %v928
        %v935 = vmax.f32 %v923, %v929
        %v936 = vmax.f32 %v924, %v930
        %v937 = vmax.f32 %v925, %v931
        %v938 = vpack.c.bf16 %v934, %v932
        %v939 = vpack.c.bf16 %v935, %v933
        %v940 = vpack.c.bf16 %v936, %v936
        %v941 = vpack.c.bf16 %v937, %v937
        %v942 = vld [vmem:[%s4] sm:$0xff]
        %v943 = vld [vmem:[%s4 + $0x8] sm:$0xff]
        %v944 = vld [vmem:[%s4 + $0x10] sm:$0xff]
        %v945 = vld [vmem:[%s4 + $0x18] sm:$0xff]
        %v946 = vld [vmem:[%s4 + $0x20] sm:$0xff]
        %v947 = vld [vmem:[%s4 + $0x28] sm:$0xff]
        %v948 = vld [vmem:[%s4 + $0x30] sm:$0xff]
        %v949 = vld [vmem:[%s4 + $0x38] sm:$0xff]
        %v950 = vld [vmem:[%s4 + $0x40] sm:$0xff]
        %v951 = vld [vmem:[%s4 + $0x48] sm:$0xff]
        %v952 = vld [vmem:[%s4 + $0x50] sm:$0xff]
        %v953 = vld [vmem:[%s4 + $0x58] sm:$0xff]
        %v954 = vld [vmem:[%s4 + $0x60] sm:$0xff]
        %v955 = vld [vmem:[%s4 + $0x68] sm:$0xff]
        %v956 = vld [vmem:[%s4 + $0x70] sm:$0xff]
        %v957 = vld [vmem:[%s4 + $0x78] sm:$0xff]
        %v958 = vld [vmem:[%s4 + $0x80] sm:$0xff]
        %v959 = vld [vmem:[%s4 + $0x88] sm:$0xff]
        %v960 = vld [vmem:[%s4 + $0x90] sm:$0xff]
        %v961 = vld [vmem:[%s4 + $0x98] sm:$0xff]
        %v962 = vld [vmem:[%s4 + $0xa0] sm:$0xff]
        %v963 = vld [vmem:[%s4 + $0xa8] sm:$0xff]
        %v964 = vld [vmem:[%s4 + $0xb0] sm:$0xff]
        %v965 = vld [vmem:[%s4 + $0xb8] sm:$0xff]
        %v966 = vld [vmem:[%s4 + $0xc0] sm:$0xff]
        %v967 = vld [vmem:[%s4 + $0xc8] sm:$0xff]
        %v968 = vld [vmem:[%s4 + $0xd0] sm:$0xff]
        %v969 = vld [vmem:[%s4 + $0xd8] sm:$0xff]
        %v970 = vld [vmem:[%s4 + $0xe0] sm:$0xff]
        %v971 = vld [vmem:[%s4 + $0xe8] sm:$0x33]
        %v1002 = vunpack.c.l.b16 %v942
        %v1003 = vunpack.c.h.b16 %v942
        %v1004 = vunpack.c.l.b16 %v943
        %v1005 = vunpack.c.h.b16 %v943
        %v1006 = vunpack.c.l.b16 %v944
        %v1007 = vunpack.c.h.b16 %v944
        %v1008 = vunpack.c.l.b16 %v945
        %v1009 = vunpack.c.h.b16 %v945
        %v1010 = vunpack.c.l.b16 %v946
        %v1011 = vunpack.c.h.b16 %v946
        %v1012 = vunpack.c.l.b16 %v947
        %v1013 = vunpack.c.h.b16 %v947
        %v1014 = vunpack.c.l.b16 %v948
        %v1015 = vunpack.c.h.b16 %v948
        %v1016 = vunpack.c.l.b16 %v949
        %v1017 = vunpack.c.h.b16 %v949
        %v1018 = vunpack.c.l.b16 %v950
        %v1019 = vunpack.c.h.b16 %v950
        %v1020 = vunpack.c.l.b16 %v951
        %v1021 = vunpack.c.h.b16 %v951
        %v1022 = vunpack.c.l.b16 %v952
        %v1023 = vunpack.c.h.b16 %v952
        %v1024 = vunpack.c.l.b16 %v953
        %v1025 = vunpack.c.h.b16 %v953
        %v1026 = vunpack.c.l.b16 %v954
        %v1027 = vunpack.c.h.b16 %v954
        %v1028 = vunpack.c.l.b16 %v955
        %v1029 = vunpack.c.h.b16 %v955
        %v1030 = vunpack.c.l.b16 %v956
        %v1031 = vunpack.c.h.b16 %v956
        %v1032 = vunpack.c.l.b16 %v957
        %v1033 = vunpack.c.h.b16 %v957
        %v1034 = vunpack.c.l.b16 %v958
        %v1035 = vunpack.c.h.b16 %v958
        %v1036 = vunpack.c.l.b16 %v959
        %v1037 = vunpack.c.h.b16 %v959
        %v1038 = vunpack.c.l.b16 %v960
        %v1039 = vunpack.c.h.b16 %v960
        %v1040 = vunpack.c.l.b16 %v961
        %v1041 = vunpack.c.h.b16 %v961
        %v1042 = vunpack.c.l.b16 %v962
        %v1043 = vunpack.c.h.b16 %v962
        %v1044 = vunpack.c.l.b16 %v963
        %v1045 = vunpack.c.h.b16 %v963
        %v1046 = vunpack.c.l.b16 %v964
        %v1047 = vunpack.c.h.b16 %v964
        %v1048 = vunpack.c.l.b16 %v965
        %v1049 = vunpack.c.h.b16 %v965
        %v1050 = vunpack.c.l.b16 %v966
        %v1051 = vunpack.c.h.b16 %v966
        %v1052 = vunpack.c.l.b16 %v967
        %v1053 = vunpack.c.h.b16 %v967
        %v1054 = vunpack.c.l.b16 %v968
        %v1055 = vunpack.c.h.b16 %v968
        %v1056 = vunpack.c.l.b16 %v969
        %v1057 = vunpack.c.h.b16 %v969
        %v1058 = vunpack.c.l.b16 %v970
        %v1059 = vunpack.c.h.b16 %v970
        %v1060 = vunpack.c.l.b16 %v971
        %v1061 = vunpack.c.h.b16 %v971
        %v1062 = vpack.c.b16 %v1004, %v1002
        %v1063 = vpack.c.b16 %v1005, %v1003
        %v1064 = vpack.c.b16 %v1008, %v1006
        %v1065 = vpack.c.b16 %v1009, %v1007
        %v1066 = vpack.c.b16 %v1012, %v1010
        %v1067 = vpack.c.b16 %v1013, %v1011
        %v1068 = vpack.c.b16 %v1016, %v1014
        %v1069 = vpack.c.b16 %v1017, %v1015
        %v1070 = vpack.c.b16 %v1020, %v1018
        %v1071 = vpack.c.b16 %v1021, %v1019
        %v1072 = vpack.c.b16 %v1024, %v1022
        %v1073 = vpack.c.b16 %v1025, %v1023
        %v1074 = vpack.c.b16 %v1028, %v1026
        %v1075 = vpack.c.b16 %v1029, %v1027
        %v1076 = vpack.c.b16 %v1032, %v1030
        %v1077 = vpack.c.b16 %v1033, %v1031
        %v1078 = vpack.c.b16 %v1036, %v1034
        %v1079 = vpack.c.b16 %v1037, %v1035
        %v1080 = vpack.c.b16 %v1040, %v1038
        %v1081 = vpack.c.b16 %v1041, %v1039
        %v1082 = vpack.c.b16 %v1044, %v1042
        %v1083 = vpack.c.b16 %v1045, %v1043
        %v1084 = vpack.c.b16 %v1048, %v1046
        %v1085 = vpack.c.b16 %v1049, %v1047
        %v1086 = vpack.c.b16 %v1052, %v1050
        %v1087 = vpack.c.b16 %v1053, %v1051
        %v1088 = vpack.c.b16 %v1056, %v1054
        %v1089 = vpack.c.b16 %v1057, %v1055
        %v1090 = vpack.c.b16 %v1060, %v1058
        %v1091 = vpack.c.b16 %v1061, %v1059
        %vm1120 = vcmask 875520
        %v1122 = vsel %vm1120, %v939, 0
        %v1125 = vsel %vm1120, %v941, 0
        %vm1127 = vcmask 1044480
        %vm1128 = vcmask 1045504
        %v1129 = vsel %vm1127, 4294967295, 65535
        %v1130 = vsel %vm1128, %v1129, 0
        %v1132 = vand.u32 %v1090, %v1130
        %v1135 = vand.u32 %v1091, %v1130
        %1137 = vmatprep.subr.bf16.mxu0 %v1063
        %1138 = vmatpush1.bf16.msra.mxu0 %v1062
        %1139 = vmatprep.subr.bf16.mxu0 %v1065
        %1140 = vmatpush1.bf16.msra.mxu0 %v1064
        %1141 = vmatprep.subr.bf16.mxu0 %v1067
        %1142 = vmatpush1.bf16.msra.mxu0 %v1066
        %1143 = vmatprep.subr.bf16.mxu0 %v1069
        %1144 = vmatpush1.bf16.msra.mxu0 %v1068
        %1145 = vmatprep.subr.bf16.mxu0 %v1071
        %1146 = vmatpush1.bf16.msra.mxu0 %v1070
        %1147 = vmatprep.subr.bf16.mxu0 %v1073
        %1148 = vmatpush1.bf16.msra.mxu0 %v1072
        %1149 = vmatprep.subr.bf16.mxu0 %v1075
        %1150 = vmatpush1.bf16.msra.mxu0 %v1074
        %1151 = vmatprep.subr.bf16.mxu0 %v1077
        %1152 = vmatpush1.bf16.msra.mxu0 %v1076
        %1153 = vmatprep.subr.bf16.mxu0 %v1079
        %1154 = vmatpush1.bf16.msra.mxu0 %v1078
        %1155 = vmatprep.subr.bf16.mxu0 %v1081
        %1156 = vmatpush1.bf16.msra.mxu0 %v1080
        %1157 = vmatprep.subr.bf16.mxu0 %v1083
        %1158 = vmatpush1.bf16.msra.mxu0 %v1082
        %1159 = vmatprep.subr.bf16.mxu0 %v1085
        %1160 = vmatpush1.bf16.msra.mxu0 %v1084
        %1161 = vmatprep.subr.bf16.mxu0 %v1087
        %1162 = vmatpush1.bf16.msra.mxu0 %v1086
        %1163 = vmatprep.subr.bf16.mxu0 %v1089
        %1164 = vmatpush1.bf16.msra.mxu0 %v1088
        %1165 = vmatprep.subr.bf16.mxu0 %v1135
        %1166 = vmatpush1.bf16.msra.mxu0 %v1132
        %1167 = vmatprep.subr.bf16.mxu0 0
        %1168 = vmatpush1.bf16.msra.mxu0 0
        %1169 = vmatprep.mubr.bf16.mxu0 %v1122
        %1170 = vmatmul.mubr.bf16.gmra.mrb[0].mxu0 %v938
        %v1171 = vpop.f32.mrb[0].mxu0
        %v1172 = vadd.f32 0.0, %v1171
        %v1173 = vpop.f32.mrb[0].mxu0
        %v1174 = vadd.f32 0.0, %v1173
        %v1175 = vpop.f32.mrb[0].mxu0
        %v1176 = vadd.f32 0.0, %v1175
        %v1177 = vpop.f32.mrb[0].mxu0
        %v1178 = vadd.f32 0.0, %v1177
        %1179 = vmatprep.mubr.bf16.mxu0 %v1125
        %1180 = vmatmul.mubr.bf16.gmra.mrb[0].mxu0 %v940
        %v1181 = vpop.f32.mrb[0].mxu0
        %v1182 = vadd.f32 0.0, %v1181
        %v1183 = vpop.f32.mrb[0].mxu0
        %v1184 = vadd.f32 0.0, %v1183
        %v1185 = vpop.f32.mrb[0].mxu0
        %v1186 = vpop.f32.mrb[0].mxu0
        %1187 = vdwg.mxu0
        %v1188 = vld [vmem:[%s5] sm:$0xf]
        %v1191 = vunpack.c.l.s4 1983009808
        %v1192 = vunpack.c.0.s8 %v1191
        %v1193 = vlaneseq
        %v1194 = vshrl.u32 %v1193, 7
        %v1195 = vsub.s32 %v1192, %v1194
        %v1196 = vrot.slane %v1188, %v1195
        %v1197 = vcombine.high %v1196, %v1196
        %v1200 = vsel %vm1120, %v1197, 0
        %1202 = vmatprep.subr.bf16.mxu0 %v1122
        %1203 = vmatpush1.bf16.xpose.msra.mxu0 %v938
        %1204 = vmatprep.subr.bf16.mxu0 %v1125
        %1205 = vmatpush1.bf16.xpose.msra.mxu0 %v940
        %1206 = vmatprep.subr.bf16.mxu0 0
        %1207 = vmatpush1.bf16.xpose.msra.mxu0 0
        %1208 = vmatprep.subr.bf16.mxu0 0
        %1209 = vmatpush1.bf16.xpose.msra.mxu0 0
        %1210 = vmatprep.subr.bf16.mxu0 0
        %1211 = vmatpush1.bf16.xpose.msra.mxu0 0
        %1212 = vmatprep.subr.bf16.mxu0 0
        %1213 = vmatpush1.bf16.xpose.msra.mxu0 0
        %1214 = vmatprep.subr.bf16.mxu0 0
        %1215 = vmatpush1.bf16.xpose.msra.mxu0 0
        %1216 = vmatprep.subr.bf16.mxu0 0
        %1217 = vmatpush1.bf16.xpose.msra.mxu0 0
        %1218 = vmatprep.subr.bf16.mxu0 0
        %1219 = vmatpush1.bf16.xpose.msra.mxu0 0
        %1220 = vmatprep.subr.bf16.mxu0 0
        %1221 = vmatpush1.bf16.xpose.msra.mxu0 0
        %1222 = vmatprep.subr.bf16.mxu0 0
        %1223 = vmatpush1.bf16.xpose.msra.mxu0 0
        %1224 = vmatprep.subr.bf16.mxu0 0
        %1225 = vmatpush1.bf16.xpose.msra.mxu0 0
        %1226 = vmatprep.subr.bf16.mxu0 0
        %1227 = vmatpush1.bf16.xpose.msra.mxu0 0
        %1228 = vmatprep.subr.bf16.mxu0 0
        %1229 = vmatpush1.bf16.xpose.msra.mxu0 0
        %1230 = vmatprep.subr.bf16.mxu0 0
        %1231 = vmatpush1.bf16.xpose.msra.mxu0 0
        %1232 = vmatprep.subr.bf16.mxu0 0
        %1233 = vmatpush1.bf16.xpose.msra.mxu0 0
        %1234 = vmatprep.mubr.bf16.mxu0 %v1200
        %1235 = vmatmul.mubr.bf16.gmra.mrb[0].mxu0 %v1196
        %v1236 = vpop.f32.mrb[0].mxu0
        %v1237 = vadd.f32 0.0, %v1236
        %v1238 = vpop.f32.mrb[0].mxu0
        %v1239 = vpop.f32.mrb[0].mxu0
        %v1240 = vpop.f32.mrb[0].mxu0
        %1241 = vdwg.mxu0
        %1243 = vset.pattern.permute.xlu0 0
        %1244 = vperm.xlu0 %1243, %v1174
        %v1245 = vpop.permute.xlu0 %1244
        %1248 = vset.pattern.permute.xlu0 0
        %1249 = vperm.xlu0 %1248, %v1178
        %v1250 = vpop.permute.xlu0 %1249
        %1253 = vset.pattern.permute.xlu0 0
        %1254 = vperm.xlu0 %1253, %v1184
        %v1255 = vpop.permute.xlu0 %1254
        %v1257 = vlaneseq
        %v1258 = vshrl.u32 %v1257, 7
        %v1259 = vsub.s32 0, %v1258
        %v1260 = vrot.slane %v1237, %v1259
        %v1261 = vadd.f32 %v1245, %v1260
        %v1262 = vadd.f32 %v1250, %v1260
        %v1263 = vadd.f32 %v1255, %v1260
        %v1264 = vmul.f32 %v1261, 0.2
        %v1265 = vmul.f32 %v1262, 0.2
        %v1266 = vmul.f32 %v1263, 0.2
        %v1267 = vmax.f32 %v1261, %v1264
        %v1268 = vmax.f32 %v1262, %v1265
        %v1269 = vmax.f32 %v1263, %v1266
        %v1270 = vld [vmem:[%s7] sm:$0xff]
        %v1271 = vld [vmem:[%s7 + $0x8] sm:$0xff]
        %v1272 = vld [vmem:[%s7 + $0x10] sm:$0x1f]
        %v1273 = vadd.f32 %v1267, %v1270
        %v1274 = vadd.f32 %v1268, %v1271
        %v1275 = vadd.f32 %v1269, %v1272
        %vm1276 = vcmask 171008
        %v1277 = vsel %vm1276, %v1273, -inf
        %1278 = vmax.xlane.f32.xlu0 %v1277
        %v1279 = vpop.xlane.xlu0 %1278
        %v1280 = vsel %vm1276, %v1274, -inf
        %1281 = vmax.xlane.f32.xlu0 %v1280
        %v1282 = vpop.xlane.xlu0 %1281
        %vm1283 = vcmask 167936
        %v1284 = vsel %vm1283, %v1275, -inf
        %1285 = vmax.xlane.f32.xlu0 %v1284
        %v1286 = vpop.xlane.xlu0 %1285
        %v1287 = vsub.f32 %v1273, %v1279
        %v1288 = vsub.f32 %v1274, %v1282
        %v1289 = vsub.f32 %v1275, %v1286
        %v1290 = vmul.f32 %v1287, 1.442695
        %v1291 = vpow.pop %v1290
        %v1292 = vmul.f32 %v1288, 1.442695
        %v1293 = vpow.pop %v1292
        %v1294 = vmul.f32 %v1289, 1.442695
        %v1295 = vpow.pop %v1294
        %v1296 = vsel %vm1276, %v1291, 0.0
        %1297 = vadd.xlane.f32.xlu0 %v1296
        %v1298 = vpop.xlane.xlu0 %1297
        %v1299 = vsel %vm1276, %v1293, 0.0
        %1300 = vadd.xlane.f32.xlu0 %v1299
        %v1301 = vpop.xlane.xlu0 %1300
        %v1302 = vsel %vm1283, %v1295, 0.0
        %1303 = vadd.xlane.f32.xlu0 %v1302
        %v1304 = vpop.xlane.xlu0 %1303
        %v1305 = vrcp.pop %v1298
        %v1306 = vrcp.pop %v1301
        %v1307 = vrcp.pop %v1304
        %v1309 = vsel %vm1276, %v1291, 0
        %v1312 = vsel %vm1276, %v1293, 0
        %v1315 = vsel %vm1276, %v1295, 0
        %v1318 = vsel %vm1127, %v1182, 0
        %1320 = vmatprep.subr.mxu0 0.0
        %1321 = vmatpush1.msra.mxu0 %v1172
        %1322 = vmatprep.subr.mxu0 0.0
        %1323 = vmatpush1.msra.mxu0 %v1176
        %1324 = vmatprep.subr.mxu0 0.0
        %1325 = vmatpush1.msra.mxu0 %v1318
        %1326 = vmatprep.subr.mxu0 0.0
        %1327 = vmatpush1.msra.mxu0 0.0
        %1328 = vmatprep.subr.mxu0 0.0
        %1329 = vmatpush1.msra.mxu0 0.0
        %1330 = vmatprep.subr.mxu0 0.0
        %1331 = vmatpush1.msra.mxu0 0.0
        %1332 = vmatprep.subr.mxu0 0.0
        %1333 = vmatpush1.msra.mxu0 0.0
        %1334 = vmatprep.subr.mxu0 0.0
        %1335 = vmatpush1.msra.mxu0 0.0
        %1336 = vmatprep.subr.mxu0 0.0
        %1337 = vmatpush1.msra.mxu0 0.0
        %1338 = vmatprep.subr.mxu0 0.0
        %1339 = vmatpush1.msra.mxu0 0.0
        %1340 = vmatprep.subr.mxu0 0.0
        %1341 = vmatpush1.msra.mxu0 0.0
        %1342 = vmatprep.subr.mxu0 0.0
        %1343 = vmatpush1.msra.mxu0 0.0
        %1344 = vmatprep.subr.mxu0 0.0
        %1345 = vmatpush1.msra.mxu0 0.0
        %1346 = vmatprep.subr.mxu0 0.0
        %1347 = vmatpush1.msra.mxu0 0.0
        %1348 = vmatprep.subr.mxu0 0.0
        %1349 = vmatpush1.msra.mxu0 0.0
        %1350 = vmatprep.subr.mxu0 0.0
        %1351 = vmatpush1.msra.mxu0 0.0
        %1352 = vmatprep.subr.mxu0 0.0
        %1353 = vmatpush1.msra.mxu0 0.0
        %1354 = vmatprep.subr.mxu0 0.0
        %1355 = vmatpush1.msra.mxu0 0.0
        %1356 = vmatprep.subr.mxu0 0.0
        %1357 = vmatpush1.msra.mxu0 0.0
        %1358 = vmatprep.subr.mxu0 0.0
        %1359 = vmatpush1.msra.mxu0 0.0
        %1360 = vmatprep.subr.mxu0 0.0
        %1361 = vmatpush1.msra.mxu0 0.0
        %1362 = vmatprep.subr.mxu0 0.0
        %1363 = vmatpush1.msra.mxu0 0.0
        %1364 = vmatprep.subr.mxu0 0.0
        %1365 = vmatpush1.msra.mxu0 0.0
        %1366 = vmatprep.subr.mxu0 0.0
        %1367 = vmatpush1.msra.mxu0 0.0
        %1368 = vmatprep.subr.mxu0 0.0
        %1369 = vmatpush1.msra.mxu0 0.0
        %1370 = vmatprep.subr.mxu0 0.0
        %1371 = vmatpush1.msra.mxu0 0.0
        %1372 = vmatprep.subr.mxu0 0.0
        %1373 = vmatpush1.msra.mxu0 0.0
        %1374 = vmatprep.subr.mxu0 0.0
        %1375 = vmatpush1.msra.mxu0 0.0
        %1376 = vmatprep.subr.mxu0 0.0
        %1377 = vmatpush1.msra.mxu0 0.0
        %1378 = vmatprep.subr.mxu0 0.0
        %1379 = vmatpush1.msra.mxu0 0.0
        %1380 = vmatprep.subr.mxu0 0.0
        %1381 = vmatpush1.msra.mxu0 0.0
        %1382 = vmatprep.subr.mxu0 0.0
        %1383 = vmatpush1.msra.mxu0 0.0
        %1384 = vmatprep.mubr.f32.mxu0 0.0
        %1385 = vmatmul.mubr.f32.gmra.mrb[0].mxu0 %v1309
        %v1386 = vpop.f32.mrb[0].mxu0
        %v1387 = vadd.f32 0.0, %v1386
        %v1388 = vpop.f32.mrb[0].mxu0
        %1389 = vmatprep.mubr.f32.mxu0 0.0
        %1390 = vmatmul.mubr.f32.gmra.mrb[0].mxu0 %v1312
        %v1391 = vpop.f32.mrb[0].mxu0
        %v1392 = vadd.f32 0.0, %v1391
        %v1393 = vpop.f32.mrb[0].mxu0
        %1394 = vmatprep.mubr.f32.mxu0 0.0
        %1395 = vmatmul.mubr.f32.gmra.mrb[0].mxu0 %v1315
        %v1396 = vpop.f32.mrb[0].mxu0
        %v1397 = vadd.f32 0.0, %v1396
        %v1398 = vpop.f32.mrb[0].mxu0
        %1399 = vdwg.mxu0
        %v1400 = vmul.f32 %v1387, %v1305
        %v1401 = vmul.f32 %v1392, %v1306
        %v1402 = vmul.f32 %v1397, %v1307
        %1403 = vset.pattern.permute.xlu0 1
        %1404 = vperm.xlu0 %1403, %v1174
        %v1405 = vpop.permute.xlu0 %1404
        %1407 = vset.pattern.permute.xlu0 1
        %1408 = vperm.xlu0 %1407, %v1178
        %v1409 = vpop.permute.xlu0 %1408
        %1411 = vset.pattern.permute.xlu0 1
        %1412 = vperm.xlu0 %1411, %v1184
        %v1413 = vpop.permute.xlu0 %1412
        %v1415 = vlaneseq
        %v1416 = vshrl.u32 %v1415, 7
        %v1417 = vsub.s32 1, %v1416
        %v1418 = vrot.slane %v1237, %v1417
        %v1419 = vadd.f32 %v1405, %v1418
        %v1420 = vadd.f32 %v1409, %v1418
        %v1421 = vadd.f32 %v1413, %v1418
        %v1422 = vmul.f32 %v1419, 0.2
        %v1423 = vmul.f32 %v1420, 0.2
        %v1424 = vmul.f32 %v1421, 0.2
        %v1425 = vmax.f32 %v1419, %v1422
        %v1426 = vmax.f32 %v1420, %v1423
        %v1427 = vmax.f32 %v1421, %v1424
        %v1428 = vadd.f32 %v1425, %v1270
        %v1429 = vadd.f32 %v1426, %v1271
        %v1430 = vadd.f32 %v1427, %v1272
        %v1431 = vsel %vm1276, %v1428, -inf
        %1432 = vmax.xlane.f32.xlu0 %v1431
        %v1433 = vpop.xlane.xlu0 %1432
        %v1434 = vsel %vm1276, %v1429, -inf
        %1435 = vmax.xlane.f32.xlu0 %v1434
        %v1436 = vpop.xlane.xlu0 %1435
        %v1437 = vsel %vm1283, %v1430, -inf
        %1438 = vmax.xlane.f32.xlu0 %v1437
        %v1439 = vpop.xlane.xlu0 %1438
        %v1440 = vsub.f32 %v1428, %v1433
        %v1441 = vsub.f32 %v1429, %v1436
        %v1442 = vsub.f32 %v1430, %v1439
        %v1443 = vmul.f32 %v1440, 1.442695
        %v1444 = vpow.pop %v1443
        %v1445 = vmul.f32 %v1441, 1.442695
        %v1446 = vpow.pop %v1445
        %v1447 = vmul.f32 %v1442, 1.442695
        %v1448 = vpow.pop %v1447
        %v1449 = vsel %vm1276, %v1444, 0.0
        %1450 = vadd.xlane.f32.xlu0 %v1449
        %v1451 = vpop.xlane.xlu0 %1450
        %v1452 = vsel %vm1276, %v1446, 0.0
        %1453 = vadd.xlane.f32.xlu0 %v1452
        %v1454 = vpop.xlane.xlu0 %1453
        %v1455 = vsel %vm1283, %v1448, 0.0
        %1456 = vadd.xlane.f32.xlu0 %v1455
        %v1457 = vpop.xlane.xlu0 %1456
        %v1458 = vrcp.pop %v1451
        %v1459 = vrcp.pop %v1454
        %v1460 = vrcp.pop %v1457
        %1463 = vrot.lane.b32.xlu0 %v1172, 96
        %v1464 = vpop.permute.xlu0 %1463
        %1465 = vrot.lane.b32.xlu0 %v1176, 96
        %v1466 = vpop.permute.xlu0 %1465
        %1467 = vrot.lane.b32.xlu0 %v1182, 96
        %v1468 = vpop.permute.xlu0 %1467
        %v1472 = vsel %vm1276, %v1444, 0
        %v1475 = vsel %vm1276, %v1446, 0
        %v1478 = vsel %vm1276, %v1448, 0
        %v1480 = vsel %vm1127, %v1468, 0
        %1482 = vmatprep.subr.mxu0 0.0
        %1483 = vmatpush1.msra.mxu0 %v1464
        %1484 = vmatprep.subr.mxu0 0.0
        %1485 = vmatpush1.msra.mxu0 %v1466
        %1486 = vmatprep.subr.mxu0 0.0
        %1487 = vmatpush1.msra.mxu0 %v1480
        %1488 = vmatprep.subr.mxu0 0.0
        %1489 = vmatpush1.msra.mxu0 0.0
        %1490 = vmatprep.subr.mxu0 0.0
        %1491 = vmatpush1.msra.mxu0 0.0
        %1492 = vmatprep.subr.mxu0 0.0
        %1493 = vmatpush1.msra.mxu0 0.0
        %1494 = vmatprep.subr.mxu0 0.0
        %1495 = vmatpush1.msra.mxu0 0.0
        %1496 = vmatprep.subr.mxu0 0.0
        %1497 = vmatpush1.msra.mxu0 0.0
        %1498 = vmatprep.subr.mxu0 0.0
        %1499 = vmatpush1.msra.mxu0 0.0
        %1500 = vmatprep.subr.mxu0 0.0
        %1501 = vmatpush1.msra.mxu0 0.0
        %1502 = vmatprep.subr.mxu0 0.0
        %1503 = vmatpush1.msra.mxu0 0.0
        %1504 = vmatprep.subr.mxu0 0.0
        %1505 = vmatpush1.msra.mxu0 0.0
        %1506 = vmatprep.subr.mxu0 0.0
        %1507 = vmatpush1.msra.mxu0 0.0
        %1508 = vmatprep.subr.mxu0 0.0
        %1509 = vmatpush1.msra.mxu0 0.0
        %1510 = vmatprep.subr.mxu0 0.0
        %1511 = vmatpush1.msra.mxu0 0.0
        %1512 = vmatprep.subr.mxu0 0.0
        %1513 = vmatpush1.msra.mxu0 0.0
        %1514 = vmatprep.subr.mxu0 0.0
        %1515 = vmatpush1.msra.mxu0 0.0
        %1516 = vmatprep.subr.mxu0 0.0
        %1517 = vmatpush1.msra.mxu0 0.0
        %1518 = vmatprep.subr.mxu0 0.0
        %1519 = vmatpush1.msra.mxu0 0.0
        %1520 = vmatprep.subr.mxu0 0.0
        %1521 = vmatpush1.msra.mxu0 0.0
        %1522 = vmatprep.subr.mxu0 0.0
        %1523 = vmatpush1.msra.mxu0 0.0
        %1524 = vmatprep.subr.mxu0 0.0
        %1525 = vmatpush1.msra.mxu0 0.0
        %1526 = vmatprep.subr.mxu0 0.0
        %1527 = vmatpush1.msra.mxu0 0.0
        %1528 = vmatprep.subr.mxu0 0.0
        %1529 = vmatpush1.msra.mxu0 0.0
        %1530 = vmatprep.subr.mxu0 0.0
        %1531 = vmatpush1.msra.mxu0 0.0
        %1532 = vmatprep.subr.mxu0 0.0
        %1533 = vmatpush1.msra.mxu0 0.0
        %1534 = vmatprep.subr.mxu0 0.0
        %1535 = vmatpush1.msra.mxu0 0.0
        %1536 = vmatprep.subr.mxu0 0.0
        %1537 = vmatpush1.msra.mxu0 0.0
        %1538 = vmatprep.subr.mxu0 0.0
        %1539 = vmatpush1.msra.mxu0 0.0
        %1540 = vmatprep.subr.mxu0 0.0
        %1541 = vmatpush1.msra.mxu0 0.0
        %1542 = vmatprep.subr.mxu0 0.0
        %1543 = vmatpush1.msra.mxu0 0.0
        %1544 = vmatprep.subr.mxu0 0.0
        %1545 = vmatpush1.msra.mxu0 0.0
        %1546 = vmatprep.mubr.f32.mxu0 0.0
        %1547 = vmatmul.mubr.f32.gmra.mrb[0].mxu0 %v1472
        %v1548 = vpop.f32.mrb[0].mxu0
        %v1549 = vadd.f32 0.0, %v1548
        %v1550 = vpop.f32.mrb[0].mxu0
        %1551 = vmatprep.mubr.f32.mxu0 0.0
        %1552 = vmatmul.mubr.f32.gmra.mrb[0].mxu0 %v1475
        %v1553 = vpop.f32.mrb[0].mxu0
        %v1554 = vadd.f32 0.0, %v1553
        %v1555 = vpop.f32.mrb[0].mxu0
        %1556 = vmatprep.mubr.f32.mxu0 0.0
        %1557 = vmatmul.mubr.f32.gmra.mrb[0].mxu0 %v1478
        %v1558 = vpop.f32.mrb[0].mxu0
        %v1559 = vadd.f32 0.0, %v1558
        %v1560 = vpop.f32.mrb[0].mxu0
        %1561 = vdwg.mxu0
        %v1562 = vmul.f32 %v1549, %v1458
        %v1563 = vmul.f32 %v1554, %v1459
        %v1564 = vmul.f32 %v1559, %v1460
        %1565 = vset.pattern.permute.xlu0 2
        %1566 = vperm.xlu0 %1565, %v1174
        %v1567 = vpop.permute.xlu0 %1566
        %1569 = vset.pattern.permute.xlu0 2
        %1570 = vperm.xlu0 %1569, %v1178
        %v1571 = vpop.permute.xlu0 %1570
        %1573 = vset.pattern.permute.xlu0 2
        %1574 = vperm.xlu0 %1573, %v1184
        %v1575 = vpop.permute.xlu0 %1574
        %v1577 = vlaneseq
        %v1578 = vshrl.u32 %v1577, 7
        %v1579 = vsub.s32 2, %v1578
        %v1580 = vrot.slane %v1237, %v1579
        %v1581 = vadd.f32 %v1567, %v1580
        %v1582 = vadd.f32 %v1571, %v1580
        %v1583 = vadd.f32 %v1575, %v1580
        %v1584 = vmul.f32 %v1581, 0.2
        %v1585 = vmul.f32 %v1582, 0.2
        %v1586 = vmul.f32 %v1583, 0.2
        %v1587 = vmax.f32 %v1581, %v1584
        %v1588 = vmax.f32 %v1582, %v1585
        %v1589 = vmax.f32 %v1583, %v1586
        %v1590 = vadd.f32 %v1587, %v1270
        %v1591 = vadd.f32 %v1588, %v1271
        %v1592 = vadd.f32 %v1589, %v1272
        %v1593 = vsel %vm1276, %v1590, -inf
        %1594 = vmax.xlane.f32.xlu0 %v1593
        %v1595 = vpop.xlane.xlu0 %1594
        %v1596 = vsel %vm1276, %v1591, -inf
        %1597 = vmax.xlane.f32.xlu0 %v1596
        %v1598 = vpop.xlane.xlu0 %1597
        %v1599 = vsel %vm1283, %v1592, -inf
        %1600 = vmax.xlane.f32.xlu0 %v1599
        %v1601 = vpop.xlane.xlu0 %1600
        %v1602 = vsub.f32 %v1590, %v1595
        %v1603 = vsub.f32 %v1591, %v1598
        %v1604 = vsub.f32 %v1592, %v1601
        %v1605 = vmul.f32 %v1602, 1.442695
        %v1606 = vpow.pop %v1605
        %v1607 = vmul.f32 %v1603, 1.442695
        %v1608 = vpow.pop %v1607
        %v1609 = vmul.f32 %v1604, 1.442695
        %v1610 = vpow.pop %v1609
        %v1611 = vsel %vm1276, %v1606, 0.0
        %1612 = vadd.xlane.f32.xlu0 %v1611
        %v1613 = vpop.xlane.xlu0 %1612
        %v1614 = vsel %vm1276, %v1608, 0.0
        %1615 = vadd.xlane.f32.xlu0 %v1614
        %v1616 = vpop.xlane.xlu0 %1615
        %v1617 = vsel %vm1283, %v1610, 0.0
        %1618 = vadd.xlane.f32.xlu0 %v1617
        %v1619 = vpop.xlane.xlu0 %1618
        %v1620 = vrcp.pop %v1613
        %v1621 = vrcp.pop %v1616
        %v1622 = vrcp.pop %v1619
        %1623 = vrot.lane.b32.xlu0 %v1172, 64
        %v1624 = vpop.permute.xlu0 %1623
        %1625 = vrot.lane.b32.xlu0 %v1176, 64
        %v1626 = vpop.permute.xlu0 %1625
        %1627 = vrot.lane.b32.xlu0 %v1182, 64
        %v1628 = vpop.permute.xlu0 %1627
        %v1632 = vsel %vm1276, %v1606, 0
        %v1635 = vsel %vm1276, %v1608, 0
        %v1638 = vsel %vm1276, %v1610, 0
        %v1640 = vsel %vm1127, %v1628, 0
        %1642 = vmatprep.subr.mxu0 0.0
        %1643 = vmatpush1.msra.mxu0 %v1624
        %1644 = vmatprep.subr.mxu0 0.0
        %1645 = vmatpush1.msra.mxu0 %v1626
        %1646 = vmatprep.subr.mxu0 0.0
        %1647 = vmatpush1.msra.mxu0 %v1640
        %1648 = vmatprep.subr.mxu0 0.0
        %1649 = vmatpush1.msra.mxu0 0.0
        %1650 = vmatprep.subr.mxu0 0.0
        %1651 = vmatpush1.msra.mxu0 0.0
        %1652 = vmatprep.subr.mxu0 0.0
        %1653 = vmatpush1.msra.mxu0 0.0
        %1654 = vmatprep.subr.mxu0 0.0
        %1655 = vmatpush1.msra.mxu0 0.0
        %1656 = vmatprep.subr.mxu0 0.0
        %1657 = vmatpush1.msra.mxu0 0.0
        %1658 = vmatprep.subr.mxu0 0.0
        %1659 = vmatpush1.msra.mxu0 0.0
        %1660 = vmatprep.subr.mxu0 0.0
        %1661 = vmatpush1.msra.mxu0 0.0
        %1662 = vmatprep.subr.mxu0 0.0
        %1663 = vmatpush1.msra.mxu0 0.0
        %1664 = vmatprep.subr.mxu0 0.0
        %1665 = vmatpush1.msra.mxu0 0.0
        %1666 = vmatprep.subr.mxu0 0.0
        %1667 = vmatpush1.msra.mxu0 0.0
        %1668 = vmatprep.subr.mxu0 0.0
        %1669 = vmatpush1.msra.mxu0 0.0
        %1670 = vmatprep.subr.mxu0 0.0
        %1671 = vmatpush1.msra.mxu0 0.0
        %1672 = vmatprep.subr.mxu0 0.0
        %1673 = vmatpush1.msra.mxu0 0.0
        %1674 = vmatprep.subr.mxu0 0.0
        %1675 = vmatpush1.msra.mxu0 0.0
        %1676 = vmatprep.subr.mxu0 0.0
        %1677 = vmatpush1.msra.mxu0 0.0
        %1678 = vmatprep.subr.mxu0 0.0
        %1679 = vmatpush1.msra.mxu0 0.0
        %1680 = vmatprep.subr.mxu0 0.0
        %1681 = vmatpush1.msra.mxu0 0.0
        %1682 = vmatprep.subr.mxu0 0.0
        %1683 = vmatpush1.msra.mxu0 0.0
        %1684 = vmatprep.subr.mxu0 0.0
        %1685 = vmatpush1.msra.mxu0 0.0
        %1686 = vmatprep.subr.mxu0 0.0
        %1687 = vmatpush1.msra.mxu0 0.0
        %1688 = vmatprep.subr.mxu0 0.0
        %1689 = vmatpush1.msra.mxu0 0.0
        %1690 = vmatprep.subr.mxu0 0.0
        %1691 = vmatpush1.msra.mxu0 0.0
        %1692 = vmatprep.subr.mxu0 0.0
        %1693 = vmatpush1.msra.mxu0 0.0
        %1694 = vmatprep.subr.mxu0 0.0
        %1695 = vmatpush1.msra.mxu0 0.0
        %1696 = vmatprep.subr.mxu0 0.0
        %1697 = vmatpush1.msra.mxu0 0.0
        %1698 = vmatprep.subr.mxu0 0.0
        %1699 = vmatpush1.msra.mxu0 0.0
        %1700 = vmatprep.subr.mxu0 0.0
        %1701 = vmatpush1.msra.mxu0 0.0
        %1702 = vmatprep.subr.mxu0 0.0
        %1703 = vmatpush1.msra.mxu0 0.0
        %1704 = vmatprep.subr.mxu0 0.0
        %1705 = vmatpush1.msra.mxu0 0.0
        %1706 = vmatprep.mubr.f32.mxu0 0.0
        %1707 = vmatmul.mubr.f32.gmra.mrb[0].mxu0 %v1632
        %v1708 = vpop.f32.mrb[0].mxu0
        %v1709 = vadd.f32 0.0, %v1708
        %v1710 = vpop.f32.mrb[0].mxu0
        %1711 = vmatprep.mubr.f32.mxu0 0.0
        %1712 = vmatmul.mubr.f32.gmra.mrb[0].mxu0 %v1635
        %v1713 = vpop.f32.mrb[0].mxu0
        %v1714 = vadd.f32 0.0, %v1713
        %v1715 = vpop.f32.mrb[0].mxu0
        %1716 = vmatprep.mubr.f32.mxu0 0.0
        %1717 = vmatmul.mubr.f32.gmra.mrb[0].mxu0 %v1638
        %v1718 = vpop.f32.mrb[0].mxu0
        %v1719 = vadd.f32 0.0, %v1718
        %v1720 = vpop.f32.mrb[0].mxu0
        %1721 = vdwg.mxu0
        %v1722 = vmul.f32 %v1709, %v1620
        %v1723 = vmul.f32 %v1714, %v1621
        %v1724 = vmul.f32 %v1719, %v1622
        %1725 = vset.pattern.permute.xlu0 3
        %1726 = vperm.xlu0 %1725, %v1174
        %v1727 = vpop.permute.xlu0 %1726
        %1729 = vset.pattern.permute.xlu0 3
        %1730 = vperm.xlu0 %1729, %v1178
        %v1731 = vpop.permute.xlu0 %1730
        %1733 = vset.pattern.permute.xlu0 3
        %1734 = vperm.xlu0 %1733, %v1184
        %v1735 = vpop.permute.xlu0 %1734
        %v1737 = vlaneseq
        %v1738 = vshrl.u32 %v1737, 7
        %v1739 = vsub.s32 3, %v1738
        %v1740 = vrot.slane %v1237, %v1739
        %v1741 = vadd.f32 %v1727, %v1740
        %v1742 = vadd.f32 %v1731, %v1740
        %v1743 = vadd.f32 %v1735, %v1740
        %v1744 = vmul.f32 %v1741, 0.2
        %v1745 = vmul.f32 %v1742, 0.2
        %v1746 = vmul.f32 %v1743, 0.2
        %v1747 = vmax.f32 %v1741, %v1744
        %v1748 = vmax.f32 %v1742, %v1745
        %v1749 = vmax.f32 %v1743, %v1746
        %v1750 = vadd.f32 %v1747, %v1270
        %v1751 = vadd.f32 %v1748, %v1271
        %v1752 = vadd.f32 %v1749, %v1272
        %v1753 = vsel %vm1276, %v1750, -inf
        %1754 = vmax.xlane.f32.xlu0 %v1753
        %v1755 = vpop.xlane.xlu0 %1754
        %v1756 = vsel %vm1276, %v1751, -inf
        %1757 = vmax.xlane.f32.xlu0 %v1756
        %v1758 = vpop.xlane.xlu0 %1757
        %v1759 = vsel %vm1283, %v1752, -inf
        %1760 = vmax.xlane.f32.xlu0 %v1759
        %v1761 = vpop.xlane.xlu0 %1760
        %v1762 = vsub.f32 %v1750, %v1755
        %v1763 = vsub.f32 %v1751, %v1758
        %v1764 = vsub.f32 %v1752, %v1761
        %v1765 = vmul.f32 %v1762, 1.442695
        %v1766 = vpow.pop %v1765
        %v1767 = vmul.f32 %v1763, 1.442695
        %v1768 = vpow.pop %v1767
        %v1769 = vmul.f32 %v1764, 1.442695
        %v1770 = vpow.pop %v1769
        %v1771 = vsel %vm1276, %v1766, 0.0
        %1772 = vadd.xlane.f32.xlu0 %v1771
        %v1773 = vpop.xlane.xlu0 %1772
        %v1774 = vsel %vm1276, %v1768, 0.0
        %1775 = vadd.xlane.f32.xlu0 %v1774
        %v1776 = vpop.xlane.xlu0 %1775
        %v1777 = vsel %vm1283, %v1770, 0.0
        %1778 = vadd.xlane.f32.xlu0 %v1777
        %v1779 = vpop.xlane.xlu0 %1778
        %v1780 = vrcp.pop %v1773
        %v1781 = vrcp.pop %v1776
        %v1782 = vrcp.pop %v1779
        %1783 = vrot.lane.b32.xlu0 %v1172, 32
        %v1784 = vpop.permute.xlu0 %1783
        %1785 = vrot.lane.b32.xlu0 %v1176, 32
        %v1786 = vpop.permute.xlu0 %1785
        %1787 = vrot.lane.b32.xlu0 %v1182, 32
        %v1788 = vpop.permute.xlu0 %1787
        %v1792 = vsel %vm1276, %v1766, 0
        %v1795 = vsel %vm1276, %v1768, 0
        %v1798 = vsel %vm1276, %v1770, 0
        %v1800 = vsel %vm1127, %v1788, 0
        %1802 = vmatprep.subr.mxu0 0.0
        %1803 = vmatpush1.msra.mxu0 %v1784
        %1804 = vmatprep.subr.mxu0 0.0
        %1805 = vmatpush1.msra.mxu0 %v1786
        %1806 = vmatprep.subr.mxu0 0.0
        %1807 = vmatpush1.msra.mxu0 %v1800
        %1808 = vmatprep.subr.mxu0 0.0
        %1809 = vmatpush1.msra.mxu0 0.0
        %1810 = vmatprep.subr.mxu0 0.0
        %1811 = vmatpush1.msra.mxu0 0.0
        %1812 = vmatprep.subr.mxu0 0.0
        %1813 = vmatpush1.msra.mxu0 0.0
        %1814 = vmatprep.subr.mxu0 0.0
        %1815 = vmatpush1.msra.mxu0 0.0
        %1816 = vmatprep.subr.mxu0 0.0
        %1817 = vmatpush1.msra.mxu0 0.0
        %1818 = vmatprep.subr.mxu0 0.0
        %1819 = vmatpush1.msra.mxu0 0.0
        %1820 = vmatprep.subr.mxu0 0.0
        %1821 = vmatpush1.msra.mxu0 0.0
        %1822 = vmatprep.subr.mxu0 0.0
        %1823 = vmatpush1.msra.mxu0 0.0
        %1824 = vmatprep.subr.mxu0 0.0
        %1825 = vmatpush1.msra.mxu0 0.0
        %1826 = vmatprep.subr.mxu0 0.0
        %1827 = vmatpush1.msra.mxu0 0.0
        %1828 = vmatprep.subr.mxu0 0.0
        %1829 = vmatpush1.msra.mxu0 0.0
        %1830 = vmatprep.subr.mxu0 0.0
        %1831 = vmatpush1.msra.mxu0 0.0
        %1832 = vmatprep.subr.mxu0 0.0
        %1833 = vmatpush1.msra.mxu0 0.0
        %1834 = vmatprep.subr.mxu0 0.0
        %1835 = vmatpush1.msra.mxu0 0.0
        %1836 = vmatprep.subr.mxu0 0.0
        %1837 = vmatpush1.msra.mxu0 0.0
        %1838 = vmatprep.subr.mxu0 0.0
        %1839 = vmatpush1.msra.mxu0 0.0
        %1840 = vmatprep.subr.mxu0 0.0
        %1841 = vmatpush1.msra.mxu0 0.0
        %1842 = vmatprep.subr.mxu0 0.0
        %1843 = vmatpush1.msra.mxu0 0.0
        %1844 = vmatprep.subr.mxu0 0.0
        %1845 = vmatpush1.msra.mxu0 0.0
        %1846 = vmatprep.subr.mxu0 0.0
        %1847 = vmatpush1.msra.mxu0 0.0
        %1848 = vmatprep.subr.mxu0 0.0
        %1849 = vmatpush1.msra.mxu0 0.0
        %1850 = vmatprep.subr.mxu0 0.0
        %1851 = vmatpush1.msra.mxu0 0.0
        %1852 = vmatprep.subr.mxu0 0.0
        %1853 = vmatpush1.msra.mxu0 0.0
        %1854 = vmatprep.subr.mxu0 0.0
        %1855 = vmatpush1.msra.mxu0 0.0
        %1856 = vmatprep.subr.mxu0 0.0
        %1857 = vmatpush1.msra.mxu0 0.0
        %1858 = vmatprep.subr.mxu0 0.0
        %1859 = vmatpush1.msra.mxu0 0.0
        %1860 = vmatprep.subr.mxu0 0.0
        %1861 = vmatpush1.msra.mxu0 0.0
        %1862 = vmatprep.subr.mxu0 0.0
        %1863 = vmatpush1.msra.mxu0 0.0
        %1864 = vmatprep.subr.mxu0 0.0
        %1865 = vmatpush1.msra.mxu0 0.0
        %1866 = vmatprep.mubr.f32.mxu0 0.0
        %1867 = vmatmul.mubr.f32.gmra.mrb[0].mxu0 %v1792
        %v1868 = vpop.f32.mrb[0].mxu0
        %v1869 = vadd.f32 0.0, %v1868
        %v1870 = vpop.f32.mrb[0].mxu0
        %1871 = vmatprep.mubr.f32.mxu0 0.0
        %1872 = vmatmul.mubr.f32.gmra.mrb[0].mxu0 %v1795
        %v1873 = vpop.f32.mrb[0].mxu0
        %v1874 = vadd.f32 0.0, %v1873
        %v1875 = vpop.f32.mrb[0].mxu0
        %1876 = vmatprep.mubr.f32.mxu0 0.0
        %1877 = vmatmul.mubr.f32.gmra.mrb[0].mxu0 %v1798
        %v1878 = vpop.f32.mrb[0].mxu0
        %v1879 = vadd.f32 0.0, %v1878
        %v1880 = vpop.f32.mrb[0].mxu0
        %1881 = vdwg.mxu0
        %v1882 = vmul.f32 %v1869, %v1780
        %v1883 = vmul.f32 %v1874, %v1781
        %v1884 = vmul.f32 %v1879, %v1782
        %1888 = vrot.lane.b32.xlu0 %v1562, 32
        %v1889 = vpop.permute.xlu0 %1888
        %1890 = vrot.lane.b32.xlu0 %v1563, 32
        %v1891 = vpop.permute.xlu0 %1890
        %1892 = vrot.lane.b32.xlu0 %v1564, 32
        %v1893 = vpop.permute.xlu0 %1892
        %1900 = vrot.lane.b32.xlu0 %v1722, 64
        %v1901 = vpop.permute.xlu0 %1900
        %1902 = vrot.lane.b32.xlu0 %v1723, 64
        %v1903 = vpop.permute.xlu0 %1902
        %1904 = vrot.lane.b32.xlu0 %v1724, 64
        %v1905 = vpop.permute.xlu0 %1904
        %1912 = vrot.lane.b32.xlu0 %v1882, 96
        %v1913 = vpop.permute.xlu0 %1912
        %1914 = vrot.lane.b32.xlu0 %v1883, 96
        %v1915 = vpop.permute.xlu0 %1914
        %1916 = vrot.lane.b32.xlu0 %v1884, 96
        %v1917 = vpop.permute.xlu0 %1916
        %vm1921 = vcmask 261120
        %v1922 = vsel %vm1921, %v1400, %v1889
        %v1923 = vsel %vm1921, %v1401, %v1891
        %v1924 = vsel %vm1921, %v1402, %v1893
        %vm1925 = vcmask 523264
        %v1926 = vsel %vm1925, %v1922, %v1901
        %v1927 = vsel %vm1925, %v1923, %v1903
        %v1928 = vsel %vm1925, %v1924, %v1905
        %vm1929 = vcmask 785408
        %v1930 = vsel %vm1929, %v1926, %v1913
        %v1931 = vsel %vm1929, %v1927, %v1915
        %v1932 = vsel %vm1929, %v1928, %v1917
        %v1933 = vld [vmem:[%s6] sm:$0x1]
        %v1935 = vlaneseq
        %v1936 = vshrl.u32 %v1935, 7
        %v1937 = vsub.s32 0, %v1936
        %v1938 = vrot.slane %v1933, %v1937
        %v1940 = vadd.f32 %v1930, %v1938
        %v1941 = vadd.f32 %v1931, %v1938
        %v1942 = vadd.f32 %v1932, %v1938
        %v1943 = vpack.c.bf16 %v1941, %v1940
        %v1944 = vpack.c.bf16 %v1942, %v1942
        %v1945 = vld [vmem:[%s9] sm:$0xff]
        %v1946 = vld [vmem:[%s9 + $0x8] sm:$0xf]
        %v1947 = vld [vmem:[%s9 + $0xc] sm:$0xff]
        %v1948 = vld [vmem:[%s9 + $0x14] sm:$0xf]
        %v1949 = vld [vmem:[%s9 + $0x18] sm:$0xff]
        %v1950 = vld [vmem:[%s9 + $0x20] sm:$0xf]
        %v1951 = vld [vmem:[%s9 + $0x24] sm:$0xff]
        %v1952 = vld [vmem:[%s9 + $0x2c] sm:$0xf]
        %v1953 = vld [vmem:[%s9 + $0x30] sm:$0xff]
        %v1954 = vld [vmem:[%s9 + $0x38] sm:$0xf]
        %v1955 = vld [vmem:[%s9 + $0x3c] sm:$0xff]
        %v1956 = vld [vmem:[%s9 + $0x44] sm:$0xf]
        %v1957 = vld [vmem:[%s9 + $0x48] sm:$0xff]
        %v1958 = vld [vmem:[%s9 + $0x50] sm:$0xf]
        %v1959 = vld [vmem:[%s9 + $0x54] sm:$0xff]
        %v1960 = vld [vmem:[%s9 + $0x5c] sm:$0xf]
        %v1961 = vld [vmem:[%s9 + $0x60] sm:$0xff]
        %v1962 = vld [vmem:[%s9 + $0x68] sm:$0xf]
        %v1963 = vld [vmem:[%s9 + $0x6c] sm:$0xff]
        %v1964 = vld [vmem:[%s9 + $0x74] sm:$0xf]
        %v1965 = vld [vmem:[%s9 + $0x78] sm:$0xff]
        %v1966 = vld [vmem:[%s9 + $0x80] sm:$0xf]
        %v1967 = vld [vmem:[%s9 + $0x84] sm:$0xff]
        %v1968 = vld [vmem:[%s9 + $0x8c] sm:$0xf]
        %v1969 = vld [vmem:[%s9 + $0x90] sm:$0xff]
        %v1970 = vld [vmem:[%s9 + $0x98] sm:$0xf]
        %v1971 = vld [vmem:[%s9 + $0x9c] sm:$0xff]
        %v1972 = vld [vmem:[%s9 + $0xa4] sm:$0xf]
        %v1973 = vld [vmem:[%s9 + $0xa8] sm:$0xff]
        %v1974 = vld [vmem:[%s9 + $0xb0] sm:$0xf]
        %v1975 = vld [vmem:[%s9 + $0xb4] sm:$0xff]
        %v1976 = vld [vmem:[%s9 + $0xbc] sm:$0xf]
        %v2009 = vunpack.c.l.b16 %v1945
        %v2010 = vunpack.c.h.b16 %v1945
        %v2011 = vunpack.c.l.b16 %v1946
        %v2012 = vunpack.c.l.b16 %v1947
        %v2013 = vunpack.c.h.b16 %v1947
        %v2014 = vunpack.c.l.b16 %v1948
        %v2015 = vunpack.c.l.b16 %v1949
        %v2016 = vunpack.c.h.b16 %v1949
        %v2017 = vunpack.c.l.b16 %v1950
        %v2018 = vunpack.c.l.b16 %v1951
        %v2019 = vunpack.c.h.b16 %v1951
        %v2020 = vunpack.c.l.b16 %v1952
        %v2021 = vunpack.c.l.b16 %v1953
        %v2022 = vunpack.c.h.b16 %v1953
        %v2023 = vunpack.c.l.b16 %v1954
        %v2024 = vunpack.c.l.b16 %v1955
        %v2025 = vunpack.c.h.b16 %v1955
        %v2026 = vunpack.c.l.b16 %v1956
        %v2027 = vunpack.c.l.b16 %v1957
        %v2028 = vunpack.c.h.b16 %v1957
        %v2029 = vunpack.c.l.b16 %v1958
        %v2030 = vunpack.c.l.b16 %v1959
        %v2031 = vunpack.c.h.b16 %v1959
        %v2032 = vunpack.c.l.b16 %v1960
        %v2033 = vunpack.c.l.b16 %v1961
        %v2034 = vunpack.c.h.b16 %v1961
        %v2035 = vunpack.c.l.b16 %v1962
        %v2036 = vunpack.c.l.b16 %v1963
        %v2037 = vunpack.c.h.b16 %v1963
        %v2038 = vunpack.c.l.b16 %v1964
        %v2039 = vunpack.c.l.b16 %v1965
        %v2040 = vunpack.c.h.b16 %v1965
        %v2041 = vunpack.c.l.b16 %v1966
        %v2042 = vunpack.c.l.b16 %v1967
        %v2043 = vunpack.c.h.b16 %v1967
        %v2044 = vunpack.c.l.b16 %v1968
        %v2045 = vunpack.c.l.b16 %v1969
        %v2046 = vunpack.c.h.b16 %v1969
        %v2047 = vunpack.c.l.b16 %v1970
        %v2048 = vunpack.c.l.b16 %v1971
        %v2049 = vunpack.c.h.b16 %v1971
        %v2050 = vunpack.c.l.b16 %v1972
        %v2051 = vunpack.c.l.b16 %v1973
        %v2052 = vunpack.c.h.b16 %v1973
        %v2053 = vunpack.c.l.b16 %v1974
        %v2054 = vunpack.c.l.b16 %v1975
        %v2055 = vunpack.c.h.b16 %v1975
        %v2056 = vunpack.c.l.b16 %v1976
        %v2057 = vpack.c.b16 %v2012, %v2009
        %v2058 = vpack.c.b16 %v2013, %v2010
        %v2059 = vpack.c.b16 %v2014, %v2011
        %v2060 = vpack.c.b16 %v2018, %v2015
        %v2061 = vpack.c.b16 %v2019, %v2016
        %v2062 = vpack.c.b16 %v2020, %v2017
        %v2063 = vpack.c.b16 %v2024, %v2021
        %v2064 = vpack.c.b16 %v2025, %v2022
        %v2065 = vpack.c.b16 %v2026, %v2023
        %v2066 = vpack.c.b16 %v2030, %v2027
        %v2067 = vpack.c.b16 %v2031, %v2028
        %v2068 = vpack.c.b16 %v2032, %v2029
        %v2069 = vpack.c.b16 %v2036, %v2033
        %v2070 = vpack.c.b16 %v2037, %v2034
        %v2071 = vpack.c.b16 %v2038, %v2035
        %v2072 = vpack.c.b16 %v2042, %v2039
        %v2073 = vpack.c.b16 %v2043, %v2040
        %v2074 = vpack.c.b16 %v2044, %v2041
        %v2075 = vpack.c.b16 %v2048, %v2045
        %v2076 = vpack.c.b16 %v2049, %v2046
        %v2077 = vpack.c.b16 %v2050, %v2047
        %v2078 = vpack.c.b16 %v2054, %v2051
        %v2079 = vpack.c.b16 %v2055, %v2052
        %v2080 = vpack.c.b16 %v2056, %v2053
        %2105 = vmatprep.subr.bf16.mxu0 %v2058
        %2106 = vmatpush1.bf16.msra.mxu0 %v2057
        %2107 = vmatprep.subr.bf16.mxu0 %v2061
        %2108 = vmatpush1.bf16.msra.mxu0 %v2060
        %2109 = vmatprep.subr.bf16.mxu0 %v2064
        %2110 = vmatpush1.bf16.msra.mxu0 %v2063
        %2111 = vmatprep.subr.bf16.mxu0 %v2067
        %2112 = vmatpush1.bf16.msra.mxu0 %v2066
        %2113 = vmatprep.subr.bf16.mxu0 %v2070
        %2114 = vmatpush1.bf16.msra.mxu0 %v2069
        %2115 = vmatprep.subr.bf16.mxu0 %v2073
        %2116 = vmatpush1.bf16.msra.mxu0 %v2072
        %2117 = vmatprep.subr.bf16.mxu0 %v2076
        %2118 = vmatpush1.bf16.msra.mxu0 %v2075
        %2119 = vmatprep.subr.bf16.mxu0 %v2079
        %2120 = vmatpush1.bf16.msra.mxu0 %v2078
        %2121 = vmatprep.subr.bf16.mxu0 0
        %2122 = vmatpush1.bf16.msra.mxu0 0
        %2123 = vmatprep.subr.bf16.mxu0 0
        %2124 = vmatpush1.bf16.msra.mxu0 0
        %2125 = vmatprep.subr.bf16.mxu0 0
        %2126 = vmatpush1.bf16.msra.mxu0 0
        %2127 = vmatprep.subr.bf16.mxu0 0
        %2128 = vmatpush1.bf16.msra.mxu0 0
        %2129 = vmatprep.subr.bf16.mxu0 0
        %2130 = vmatpush1.bf16.msra.mxu0 0
        %2131 = vmatprep.subr.bf16.mxu0 0
        %2132 = vmatpush1.bf16.msra.mxu0 0
        %2133 = vmatprep.subr.bf16.mxu0 0
        %2134 = vmatpush1.bf16.msra.mxu0 0
        %2135 = vmatprep.subr.bf16.mxu0 0
        %2136 = vmatpush1.bf16.msra.mxu0 0
        %2137 = vmatprep.mubr.bf16.mxu0 0
        %2138 = vmatmul.mubr.bf16.gmra.mrb[0].mxu0 %v1943
        %v2139 = vpop.f32.mrb[0].mxu0
        %v2140 = vadd.f32 0.0, %v2139
        %v2141 = vpop.f32.mrb[0].mxu0
        %v2142 = vadd.f32 0.0, %v2141
        %v2143 = vpop.f32.mrb[0].mxu0
        %v2144 = vadd.f32 0.0, %v2143
        %v2145 = vpop.f32.mrb[0].mxu0
        %v2146 = vadd.f32 0.0, %v2145
        %2147 = vmatprep.mubr.bf16.mxu0 0
        %2148 = vmatmul.mubr.bf16.gmra.mrb[0].mxu0 %v1944
        %v2149 = vpop.f32.mrb[0].mxu0
        %v2150 = vadd.f32 0.0, %v2149
        %v2151 = vpop.f32.mrb[0].mxu0
        %v2152 = vadd.f32 0.0, %v2151
        %v2153 = vpop.f32.mrb[0].mxu0
        %v2154 = vpop.f32.mrb[0].mxu0
        %2155 = vdwg.mxu0
        %2156 = vmatprep.subr.bf16.mxu0 0
        %2157 = vmatpush1.bf16.msra.mxu0 %v2059
        %2158 = vmatprep.subr.bf16.mxu0 0
        %2159 = vmatpush1.bf16.msra.mxu0 %v2062
        %2160 = vmatprep.subr.bf16.mxu0 0
        %2161 = vmatpush1.bf16.msra.mxu0 %v2065
        %2162 = vmatprep.subr.bf16.mxu0 0
        %2163 = vmatpush1.bf16.msra.mxu0 %v2068
        %2164 = vmatprep.subr.bf16.mxu0 0
        %2165 = vmatpush1.bf16.msra.mxu0 %v2071
        %2166 = vmatprep.subr.bf16.mxu0 0
        %2167 = vmatpush1.bf16.msra.mxu0 %v2074
        %2168 = vmatprep.subr.bf16.mxu0 0
        %2169 = vmatpush1.bf16.msra.mxu0 %v2077
        %2170 = vmatprep.subr.bf16.mxu0 0
        %2171 = vmatpush1.bf16.msra.mxu0 %v2080
        %2172 = vmatprep.subr.bf16.mxu0 0
        %2173 = vmatpush1.bf16.msra.mxu0 0
        %2174 = vmatprep.subr.bf16.mxu0 0
        %2175 = vmatpush1.bf16.msra.mxu0 0
        %2176 = vmatprep.subr.bf16.mxu0 0
        %2177 = vmatpush1.bf16.msra.mxu0 0
        %2178 = vmatprep.subr.bf16.mxu0 0
        %2179 = vmatpush1.bf16.msra.mxu0 0
        %2180 = vmatprep.subr.bf16.mxu0 0
        %2181 = vmatpush1.bf16.msra.mxu0 0
        %2182 = vmatprep.subr.bf16.mxu0 0
        %2183 = vmatpush1.bf16.msra.mxu0 0
        %2184 = vmatprep.subr.bf16.mxu0 0
        %2185 = vmatpush1.bf16.msra.mxu0 0
        %2186 = vmatprep.subr.bf16.mxu0 0
        %2187 = vmatpush1.bf16.msra.mxu0 0
        %2188 = vmatprep.mubr.bf16.mxu0 0
        %2189 = vmatmul.mubr.bf16.gmra.mrb[0].mxu0 %v1943
        %v2190 = vpop.f32.mrb[0].mxu0
        %v2191 = vadd.f32 0.0, %v2190
        %v2192 = vpop.f32.mrb[0].mxu0
        %v2193 = vpop.f32.mrb[0].mxu0
        %v2194 = vadd.f32 0.0, %v2193
        %v2195 = vpop.f32.mrb[0].mxu0
        %2196 = vmatprep.mubr.bf16.mxu0 0
        %2197 = vmatmul.mubr.bf16.gmra.mrb[0].mxu0 %v1944
        %v2198 = vpop.f32.mrb[0].mxu0
        %v2199 = vadd.f32 0.0, %v2198
        %v2200 = vpop.f32.mrb[0].mxu0
        %v2201 = vpop.f32.mrb[0].mxu0
        %v2202 = vpop.f32.mrb[0].mxu0
        %2203 = vdwg.mxu0
        %v2204 = vld [vmem:[%s10] sm:$0x1]
        %v2205 = vld [vmem:[%s8] sm:$0xff]
        %v2206 = vld [vmem:[%s8 + $0x8] sm:$0xff]
        %v2207 = vld [vmem:[%s8 + $0x10] sm:$0x1f]
        %v2209 = vsel %vm1276, %v2205, 0
        %v2212 = vsel %vm1276, %v2206, 0
        %v2215 = vsel %vm1276, %v2207, 0
        %v2218 = vsel %vm1127, %v2150, 0
        %2220 = vmatprep.subr.mxu0 0.0
        %2221 = vmatpush1.msra.mxu0 %v2140
        %2222 = vmatprep.subr.mxu0 0.0
        %2223 = vmatpush1.msra.mxu0 %v2144
        %2224 = vmatprep.subr.mxu0 0.0
        %2225 = vmatpush1.msra.mxu0 %v2218
        %2226 = vmatprep.subr.mxu0 0.0
        %2227 = vmatpush1.msra.mxu0 0.0
        %2228 = vmatprep.subr.mxu0 0.0
        %2229 = vmatpush1.msra.mxu0 0.0
        %2230 = vmatprep.subr.mxu0 0.0
        %2231 = vmatpush1.msra.mxu0 0.0
        %2232 = vmatprep.subr.mxu0 0.0
        %2233 = vmatpush1.msra.mxu0 0.0
        %2234 = vmatprep.subr.mxu0 0.0
        %2235 = vmatpush1.msra.mxu0 0.0
        %2236 = vmatprep.subr.mxu0 0.0
        %2237 = vmatpush1.msra.mxu0 0.0
        %2238 = vmatprep.subr.mxu0 0.0
        %2239 = vmatpush1.msra.mxu0 0.0
        %2240 = vmatprep.subr.mxu0 0.0
        %2241 = vmatpush1.msra.mxu0 0.0
        %2242 = vmatprep.subr.mxu0 0.0
        %2243 = vmatpush1.msra.mxu0 0.0
        %2244 = vmatprep.subr.mxu0 0.0
        %2245 = vmatpush1.msra.mxu0 0.0
        %2246 = vmatprep.subr.mxu0 0.0
        %2247 = vmatpush1.msra.mxu0 0.0
        %2248 = vmatprep.subr.mxu0 0.0
        %2249 = vmatpush1.msra.mxu0 0.0
        %2250 = vmatprep.subr.mxu0 0.0
        %2251 = vmatpush1.msra.mxu0 0.0
        %2252 = vmatprep.subr.mxu0 0.0
        %2253 = vmatpush1.msra.mxu0 0.0
        %2254 = vmatprep.subr.mxu0 0.0
        %2255 = vmatpush1.msra.mxu0 0.0
        %2256 = vmatprep.subr.mxu0 0.0
        %2257 = vmatpush1.msra.mxu0 0.0
        %2258 = vmatprep.subr.mxu0 0.0
        %2259 = vmatpush1.msra.mxu0 0.0
        %2260 = vmatprep.subr.mxu0 0.0
        %2261 = vmatpush1.msra.mxu0 0.0
        %2262 = vmatprep.subr.mxu0 0.0
        %2263 = vmatpush1.msra.mxu0 0.0
        %2264 = vmatprep.subr.mxu0 0.0
        %2265 = vmatpush1.msra.mxu0 0.0
        %2266 = vmatprep.subr.mxu0 0.0
        %2267 = vmatpush1.msra.mxu0 0.0
        %2268 = vmatprep.subr.mxu0 0.0
        %2269 = vmatpush1.msra.mxu0 0.0
        %2270 = vmatprep.subr.mxu0 0.0
        %2271 = vmatpush1.msra.mxu0 0.0
        %2272 = vmatprep.subr.mxu0 0.0
        %2273 = vmatpush1.msra.mxu0 0.0
        %2274 = vmatprep.subr.mxu0 0.0
        %2275 = vmatpush1.msra.mxu0 0.0
        %2276 = vmatprep.subr.mxu0 0.0
        %2277 = vmatpush1.msra.mxu0 0.0
        %2278 = vmatprep.subr.mxu0 0.0
        %2279 = vmatpush1.msra.mxu0 0.0
        %2280 = vmatprep.subr.mxu0 0.0
        %2281 = vmatpush1.msra.mxu0 0.0
        %2282 = vmatprep.subr.mxu0 0.0
        %2283 = vmatpush1.msra.mxu0 0.0
        %2284 = vmatprep.mubr.f32.mxu0 0.0
        %2285 = vmatmul.mubr.f32.gmra.mrb[0].mxu0 %v2209
        %v2286 = vpop.f32.mrb[0].mxu0
        %v2287 = vadd.f32 0.0, %v2286
        %v2288 = vpop.f32.mrb[0].mxu0
        %2289 = vmatprep.mubr.f32.mxu0 0.0
        %2290 = vmatmul.mubr.f32.gmra.mrb[0].mxu0 %v2212
        %v2291 = vpop.f32.mrb[0].mxu0
        %v2292 = vadd.f32 0.0, %v2291
        %v2293 = vpop.f32.mrb[0].mxu0
        %2294 = vmatprep.mubr.f32.mxu0 0.0
        %2295 = vmatmul.mubr.f32.gmra.mrb[0].mxu0 %v2215
        %v2296 = vpop.f32.mrb[0].mxu0
        %v2297 = vadd.f32 0.0, %v2296
        %v2298 = vpop.f32.mrb[0].mxu0
        %2299 = vdwg.mxu0
        %v2301 = vlaneseq
        %v2302 = vshrl.u32 %v2301, 7
        %v2303 = vsub.s32 0, %v2302
        %v2304 = vrot.slane %v2204, %v2303
        %v2306 = vadd.f32 %v2304, %v2287
        %v2307 = vadd.f32 %v2304, %v2292
        %v2308 = vadd.f32 %v2304, %v2297
        %s2309 = scalar_lea.vmem %s8, 24
        %v2310 = vld [vmem:[%s2309] sm:$0xff]
        %v2311 = vld [vmem:[%s2309 + $0x8] sm:$0xff]
        %v2312 = vld [vmem:[%s2309 + $0x10] sm:$0x1f]
        %v2314 = vsel %vm1276, %v2310, 0
        %v2317 = vsel %vm1276, %v2311, 0
        %v2320 = vsel %vm1276, %v2312, 0
        %v2323 = vsel %vm1127, %v2152, 0
        %2325 = vmatprep.subr.mxu0 0.0
        %2326 = vmatpush1.msra.mxu0 %v2142
        %2327 = vmatprep.subr.mxu0 0.0
        %2328 = vmatpush1.msra.mxu0 %v2146
        %2329 = vmatprep.subr.mxu0 0.0
        %2330 = vmatpush1.msra.mxu0 %v2323
        %2331 = vmatprep.subr.mxu0 0.0
        %2332 = vmatpush1.msra.mxu0 0.0
        %2333 = vmatprep.subr.mxu0 0.0
        %2334 = vmatpush1.msra.mxu0 0.0
        %2335 = vmatprep.subr.mxu0 0.0
        %2336 = vmatpush1.msra.mxu0 0.0
        %2337 = vmatprep.subr.mxu0 0.0
        %2338 = vmatpush1.msra.mxu0 0.0
        %2339 = vmatprep.subr.mxu0 0.0
        %2340 = vmatpush1.msra.mxu0 0.0
        %2341 = vmatprep.subr.mxu0 0.0
        %2342 = vmatpush1.msra.mxu0 0.0
        %2343 = vmatprep.subr.mxu0 0.0
        %2344 = vmatpush1.msra.mxu0 0.0
        %2345 = vmatprep.subr.mxu0 0.0
        %2346 = vmatpush1.msra.mxu0 0.0
        %2347 = vmatprep.subr.mxu0 0.0
        %2348 = vmatpush1.msra.mxu0 0.0
        %2349 = vmatprep.subr.mxu0 0.0
        %2350 = vmatpush1.msra.mxu0 0.0
        %2351 = vmatprep.subr.mxu0 0.0
        %2352 = vmatpush1.msra.mxu0 0.0
        %2353 = vmatprep.subr.mxu0 0.0
        %2354 = vmatpush1.msra.mxu0 0.0
        %2355 = vmatprep.subr.mxu0 0.0
        %2356 = vmatpush1.msra.mxu0 0.0
        %2357 = vmatprep.subr.mxu0 0.0
        %2358 = vmatpush1.msra.mxu0 0.0
        %2359 = vmatprep.subr.mxu0 0.0
        %2360 = vmatpush1.msra.mxu0 0.0
        %2361 = vmatprep.subr.mxu0 0.0
        %2362 = vmatpush1.msra.mxu0 0.0
        %2363 = vmatprep.subr.mxu0 0.0
        %2364 = vmatpush1.msra.mxu0 0.0
        %2365 = vmatprep.subr.mxu0 0.0
        %2366 = vmatpush1.msra.mxu0 0.0
        %2367 = vmatprep.subr.mxu0 0.0
        %2368 = vmatpush1.msra.mxu0 0.0
        %2369 = vmatprep.subr.mxu0 0.0
        %2370 = vmatpush1.msra.mxu0 0.0
        %2371 = vmatprep.subr.mxu0 0.0
        %2372 = vmatpush1.msra.mxu0 0.0
        %2373 = vmatprep.subr.mxu0 0.0
        %2374 = vmatpush1.msra.mxu0 0.0
        %2375 = vmatprep.subr.mxu0 0.0
        %2376 = vmatpush1.msra.mxu0 0.0
        %2377 = vmatprep.subr.mxu0 0.0
        %2378 = vmatpush1.msra.mxu0 0.0
        %2379 = vmatprep.subr.mxu0 0.0
        %2380 = vmatpush1.msra.mxu0 0.0
        %2381 = vmatprep.subr.mxu0 0.0
        %2382 = vmatpush1.msra.mxu0 0.0
        %2383 = vmatprep.subr.mxu0 0.0
        %2384 = vmatpush1.msra.mxu0 0.0
        %2385 = vmatprep.subr.mxu0 0.0
        %2386 = vmatpush1.msra.mxu0 0.0
        %2387 = vmatprep.subr.mxu0 0.0
        %2388 = vmatpush1.msra.mxu0 0.0
        %2389 = vmatprep.mubr.f32.mxu0 0.0
        %2390 = vmatmul.mubr.f32.gmra.mrb[0].mxu0 %v2314
        %v2391 = vpop.f32.mrb[0].mxu0
        %v2392 = vadd.f32 0.0, %v2391
        %v2393 = vpop.f32.mrb[0].mxu0
        %2394 = vmatprep.mubr.f32.mxu0 0.0
        %2395 = vmatmul.mubr.f32.gmra.mrb[0].mxu0 %v2317
        %v2396 = vpop.f32.mrb[0].mxu0
        %v2397 = vadd.f32 0.0, %v2396
        %v2398 = vpop.f32.mrb[0].mxu0
        %2399 = vmatprep.mubr.f32.mxu0 0.0
        %2400 = vmatmul.mubr.f32.gmra.mrb[0].mxu0 %v2320
        %v2401 = vpop.f32.mrb[0].mxu0
        %v2402 = vadd.f32 0.0, %v2401
        %v2403 = vpop.f32.mrb[0].mxu0
        %2404 = vdwg.mxu0
        %v2405 = vadd.f32 %v2306, %v2392
        %v2406 = vadd.f32 %v2307, %v2397
        %v2407 = vadd.f32 %v2308, %v2402
        %s2408 = scalar_lea.vmem %s8, 48
        %v2409 = vld [vmem:[%s2408] sm:$0xff]
        %v2410 = vld [vmem:[%s2408 + $0x8] sm:$0xff]
        %v2411 = vld [vmem:[%s2408 + $0x10] sm:$0x1f]
        %v2413 = vsel %vm1276, %v2409, 0
        %v2416 = vsel %vm1276, %v2410, 0
        %v2419 = vsel %vm1276, %v2411, 0
        %v2422 = vsel %vm1127, %v2199, 0
        %2424 = vmatprep.subr.mxu0 0.0
        %2425 = vmatpush1.msra.mxu0 %v2191
        %2426 = vmatprep.subr.mxu0 0.0
        %2427 = vmatpush1.msra.mxu0 %v2194
        %2428 = vmatprep.subr.mxu0 0.0
        %2429 = vmatpush1.msra.mxu0 %v2422
        %2430 = vmatprep.subr.mxu0 0.0
        %2431 = vmatpush1.msra.mxu0 0.0
        %2432 = vmatprep.subr.mxu0 0.0
        %2433 = vmatpush1.msra.mxu0 0.0
        %2434 = vmatprep.subr.mxu0 0.0
        %2435 = vmatpush1.msra.mxu0 0.0
        %2436 = vmatprep.subr.mxu0 0.0
        %2437 = vmatpush1.msra.mxu0 0.0
        %2438 = vmatprep.subr.mxu0 0.0
        %2439 = vmatpush1.msra.mxu0 0.0
        %2440 = vmatprep.subr.mxu0 0.0
        %2441 = vmatpush1.msra.mxu0 0.0
        %2442 = vmatprep.subr.mxu0 0.0
        %2443 = vmatpush1.msra.mxu0 0.0
        %2444 = vmatprep.subr.mxu0 0.0
        %2445 = vmatpush1.msra.mxu0 0.0
        %2446 = vmatprep.subr.mxu0 0.0
        %2447 = vmatpush1.msra.mxu0 0.0
        %2448 = vmatprep.subr.mxu0 0.0
        %2449 = vmatpush1.msra.mxu0 0.0
        %2450 = vmatprep.subr.mxu0 0.0
        %2451 = vmatpush1.msra.mxu0 0.0
        %2452 = vmatprep.subr.mxu0 0.0
        %2453 = vmatpush1.msra.mxu0 0.0
        %2454 = vmatprep.subr.mxu0 0.0
        %2455 = vmatpush1.msra.mxu0 0.0
        %2456 = vmatprep.subr.mxu0 0.0
        %2457 = vmatpush1.msra.mxu0 0.0
        %2458 = vmatprep.subr.mxu0 0.0
        %2459 = vmatpush1.msra.mxu0 0.0
        %2460 = vmatprep.subr.mxu0 0.0
        %2461 = vmatpush1.msra.mxu0 0.0
        %2462 = vmatprep.subr.mxu0 0.0
        %2463 = vmatpush1.msra.mxu0 0.0
        %2464 = vmatprep.subr.mxu0 0.0
        %2465 = vmatpush1.msra.mxu0 0.0
        %2466 = vmatprep.subr.mxu0 0.0
        %2467 = vmatpush1.msra.mxu0 0.0
        %2468 = vmatprep.subr.mxu0 0.0
        %2469 = vmatpush1.msra.mxu0 0.0
        %2470 = vmatprep.subr.mxu0 0.0
        %2471 = vmatpush1.msra.mxu0 0.0
        %2472 = vmatprep.subr.mxu0 0.0
        %2473 = vmatpush1.msra.mxu0 0.0
        %2474 = vmatprep.subr.mxu0 0.0
        %2475 = vmatpush1.msra.mxu0 0.0
        %2476 = vmatprep.subr.mxu0 0.0
        %2477 = vmatpush1.msra.mxu0 0.0
        %2478 = vmatprep.subr.mxu0 0.0
        %2479 = vmatpush1.msra.mxu0 0.0
        %2480 = vmatprep.subr.mxu0 0.0
        %2481 = vmatpush1.msra.mxu0 0.0
        %2482 = vmatprep.subr.mxu0 0.0
        %2483 = vmatpush1.msra.mxu0 0.0
        %2484 = vmatprep.subr.mxu0 0.0
        %2485 = vmatpush1.msra.mxu0 0.0
        %2486 = vmatprep.subr.mxu0 0.0
        %2487 = vmatpush1.msra.mxu0 0.0
        %2488 = vmatprep.mubr.f32.mxu0 0.0
        %2489 = vmatmul.mubr.f32.gmra.mrb[0].mxu0 %v2413
        %v2490 = vpop.f32.mrb[0].mxu0
        %v2491 = vadd.f32 0.0, %v2490
        %v2492 = vpop.f32.mrb[0].mxu0
        %2493 = vmatprep.mubr.f32.mxu0 0.0
        %2494 = vmatmul.mubr.f32.gmra.mrb[0].mxu0 %v2416
        %v2495 = vpop.f32.mrb[0].mxu0
        %v2496 = vadd.f32 0.0, %v2495
        %v2497 = vpop.f32.mrb[0].mxu0
        %2498 = vmatprep.mubr.f32.mxu0 0.0
        %2499 = vmatmul.mubr.f32.gmra.mrb[0].mxu0 %v2419
        %v2500 = vpop.f32.mrb[0].mxu0
        %v2501 = vadd.f32 0.0, %v2500
        %v2502 = vpop.f32.mrb[0].mxu0
        %2503 = vdwg.mxu0
        %v2504 = vadd.f32 %v2405, %v2491
        %v2505 = vadd.f32 %v2406, %v2496
        %v2506 = vadd.f32 %v2407, %v2501
        %2507 = vst [vmem:[%s464] sm:$0xff] %v2504
        %2508 = vst [vmem:[%s464 + $0x8] sm:$0xff] %v2505
        %2509 = vst [vmem:[%s464 + $0x10] sm:$0x1f] %v2506
      $region76: #{regressor_forward.1} parent=63 // pred_fallthru
        _
      %s2510 = smul.u32 %s27, %s26
      %p2511 = scmp.lt.s32.totalorder %s2510, 1
      %s2512 = scalar_select %p2511, %s2510, 1
      %s2513 = smul.addr %s2512, 3
      %s2514 = smul.addr %s2513, 8
      %s2515 = scalar_lea.vmem %s11, %s2514
      // Predicated region
      $region77: #{regressor_forward.1} parent=63 // pred_check
        %p2516 = pneg %p307
      $region78: #{regressor_forward.1} parent=63 // pred_check_branch
        %2518 = sbr.rel (%p2516) target = $region80
      $region79: #{regressor_forward.1} parent=63 // pred_region
        %s2519 = smul.u32 %s27, %s26
      $region80: #{regressor_forward.1} parent=63 // pred_fallthru
        _
    $region64: #{regressor_forward.1} parent=5 // pred_fallthru
      _
    %p2520 = scmp.le.s32.totalorder 2, %s17
    // Predicated region
    $region81: #{regressor_forward.1} parent=5 // pred_check
      %p2521 = pneg %p2520
    $region82: #{regressor_forward.1} parent=5 // pred_check_branch
      %2523 = sbr.rel (%p2521) target = $region84
    $region83: #{regressor_forward.1} parent=5 // pred_region
      %s2524 = ssub.s32 %s17, 2
      // Predicated region
      $region85: #{regressor_forward.1} parent=83 // pred_check
        %p2525 = pneg %p313
      $region86: #{regressor_forward.1} parent=83 // pred_check_branch
        %2527 = sbr.rel (%p2525) target = $region88
      $region87: #{regressor_forward.1} parent=83 // pred_region
        %s2528 = smul.u32 %s29, %s28
        %p2529 = scmp.lt.s32.totalorder %s2528, 1
        %s2530 = scalar_select %p2529, %s2528, 1
        %s2531 = smul.addr %s2530, 3
        %s2532 = smul.addr %s2531, 8
        %s2533 = scalar_lea.vmem %s11, %s2532
      $region88: #{regressor_forward.1} parent=83 // pred_fallthru
        _
    $region84: #{regressor_forward.1} parent=5 // pred_fallthru
      _
  $region6: #{regressor_forward.1} parent=0 // loop_footer
    %s21 = sadd.s32 1, %s17
  $region7: #{regressor_forward.1} parent=0 // loop_footer_branch
    %16 = sbr.rel target = $region3
  $region8: #{regressor_forward.1} parent=0 // loop_exit
    _

</llo_original>
